<compile_context>
chip_gen: v7x
topology: tpu7x:2x2x1
jax: 0.10.0
libtpu: 0.0.40
codegen_flags: <defaults>
</compile_context>

<pallas_src>
import math
import functools

import jax
import jax.numpy as jnp
from jax.experimental import pallas as pl
from jax.experimental.pallas import tpu as pltpu


_NEG_INF = -1.0e30          # finite (not -inf): online softmax never sees NaN
_ROW_VALID_THRESH = -1.0e29  # running max below this => row fully masked


def _pick_tile(dim, target, quantum):
    """Largest tile <= target that divides `dim` and is a multiple of
    `quantum`; falls back to the full dim (always legal as a block dim)."""
    if dim <= target:
        return dim
    t = (target // quantum) * quantum
    while t >= quantum:
        if dim % t == 0:
            return t
        t -= quantum
    return dim


def _pick_head_group(n_head, d_k):
    """Smallest G dividing n_head with G*d_k a multiple of 128 (lane-dense
    blocks); falls back to all heads (block width == full model dim)."""
    for g in range(1, n_head):
        if n_head % g == 0 and (g * d_k) % 128 == 0:
            return g
    return n_head


# ----------------------------------------------------------------------------
# Fused projection: y_n = x @ W_n + b_n for n outputs, reading x once.
# Outputs marked `transposed` are written as (B, D, T) (K pre-transposed for
# the attention kernel); the transpose happens once per tile at finalize.
# ----------------------------------------------------------------------------
def _fused_proj_kernel(x_ref, w_ref, b_ref, *refs, n_out, transposed):
    out_refs = refs[:n_out]
    acc_refs = refs[n_out:]
    kk = pl.program_id(3)

    @pl.when(kk == 0)
    def _init():
        for a in acc_refs:
            a[...] = jnp.zeros(a.shape, jnp.float32)

    xb = x_ref[0]                                    # (tm, tk) bf16
    for n in range(n_out):
        acc_refs[n][...] += jnp.dot(xb, w_ref[n],
                                    preferred_element_type=jnp.float32)

    @pl.when(kk == pl.num_programs(3) - 1)
    def _finalize():
        for n in range(n_out):
            y = acc_refs[n][...] + b_ref[n]          # (tm, tn) f32
            if transposed[n]:
                y = y.T                              # (tn, tm), one XLU xpose
            out_refs[n][0] = y.astype(out_refs[n].dtype)


def fused_projection(x3d, w_stack, b_stack, transposed, *,
                     out_dtype=jnp.bfloat16,
                     tm_target=256, tn_target=256, tk_target=512):
    """x3d: (B, T, F) bf16; w_stack: (n, F, D) bf16; b_stack: (n, 1, D) f32.
    Returns n arrays: (B, T, D) normal or (B, D, T) for transposed outputs."""
    B, T, F = x3d.shape
    n = w_stack.shape[0]
    D = w_stack.shape[-1]
    # tm is also the lane dim of transposed outputs -> quantum 128 (or full T)
    tm = _pick_tile(T, tm_target, 128)
    tn = _pick_tile(D, tn_target, 128)
    tk = _pick_tile(F, tk_target, 128)
    grid = (B, T // tm, D // tn, F // tk)

    out_shapes, out_specs = [], []
    for idx in range(n):
        if transposed[idx]:
            out_shapes.append(jax.ShapeDtypeStruct((B, D, T), out_dtype))
            out_specs.append(
                pl.BlockSpec((1, tn, tm), lambda b, i, j, k: (b, j, i)))
        else:
            out_shapes.append(jax.ShapeDtypeStruct((B, T, D), out_dtype))
            out_specs.append(
                pl.BlockSpec((1, tm, tn), lambda b, i, j, k: (b, i, j)))

    return pl.pallas_call(
        functools.partial(_fused_proj_kernel, n_out=n,
                          transposed=tuple(transposed)),
        out_shape=out_shapes,
        grid_spec=pltpu.PrefetchScalarGridSpec(
            num_scalar_prefetch=0,
            grid=grid,
            in_specs=[
                pl.BlockSpec((1, tm, tk), lambda b, i, j, k: (b, i, k)),
                pl.BlockSpec((n, tk, tn), lambda b, i, j, k: (0, k, j)),
                pl.BlockSpec((n, 1, tn), lambda b, i, j, k: (0, 0, j)),
            ],
            out_specs=out_specs,
            scratch_shapes=[pltpu.VMEM((tm, tn), jnp.float32)
                            for _ in range(n)],
        ),
        compiler_params=pltpu.CompilerParams(
            dimension_semantics=("parallel", "parallel", "parallel",
                                 "arbitrary")),
        cost_estimate=pl.CostEstimate(
            flops=2 * B * T * F * D * n, transcendentals=0,
            bytes_accessed=int(x3d.size * 2 + w_stack.size * 2
                               + n * B * T * D * 2)),
    )(x3d, w_stack, b_stack)


# ----------------------------------------------------------------------------
# Plain tiled linear (output projection with K = H*Dk, cross-attention Q)
# ----------------------------------------------------------------------------
def _linear_kernel(x_ref, w_ref, b_ref, o_ref, acc_ref):
    kk = pl.program_id(2)

    @pl.when(kk == 0)
    def _init():
        acc_ref[...] = jnp.zeros(acc_ref.shape, jnp.float32)

    acc_ref[...] += jnp.dot(x_ref[...], w_ref[...],
                            preferred_element_type=jnp.float32)

    @pl.when(kk == pl.num_programs(2) - 1)
    def _finalize():
        o_ref[...] = (acc_ref[...] + b_ref[...]).astype(o_ref.dtype)


def pallas_linear(x2d, w, b, *, out_dtype=jnp.bfloat16,
                  tm_target=256, tn_target=256, tk_target=512):
    """y = x2d @ w + b.  x2d: (M, F) bf16, w: (F, D) bf16, b: (1, D) f32."""
    M, F = x2d.shape
    D = w.shape[1]
    tm = _pick_tile(M, tm_target, 16)      # bf16 sublane tile is (16, 128)
    tn = _pick_tile(D, tn_target, 128)
    tk = _pick_tile(F, tk_target, 128)
    grid = (M // tm, D // tn, F // tk)
    return pl.pallas_call(
        _linear_kernel,
        out_shape=jax.ShapeDtypeStruct((M, D), out_dtype),
        grid_spec=pltpu.PrefetchScalarGridSpec(
            num_scalar_prefetch=0,
            grid=grid,
            in_specs=[
                pl.BlockSpec((tm, tk), lambda i, j, k: (i, k)),
                pl.BlockSpec((tk, tn), lambda i, j, k: (k, j)),
                pl.BlockSpec((1, tn), lambda i, j, k: (0, j)),
            ],
            out_specs=pl.BlockSpec((tm, tn), lambda i, j, k: (i, j)),
            scratch_shapes=[pltpu.VMEM((tm, tn), jnp.float32)],
        ),
        compiler_params=pltpu.CompilerParams(
            dimension_semantics=("parallel", "parallel", "arbitrary")),
        cost_estimate=pl.CostEstimate(
            flops=2 * M * F * D, transcendentals=0,
            bytes_accessed=int(M * F * 2 + F * D * 2 + M * D * 2)),
    )(x2d, w, b)


# ----------------------------------------------------------------------------
# Flash attention.
#   q:    (B, T1, H*Dk) bf16   (1/sqrt(Dk) already folded into the projection)
#   kt:   (B, H*Dk, T2) bf16   (pre-transposed K)
#   v:    (B, T2, H*Dk) bf16
#   bias: (B, {1|T1}, T2) bf16 additive mask bias (0 keep / -1e30 masked)
#   out:  (B, T1, H*Dk) bf16, lane-dense
# Grid: (B, head_groups, T1 tiles, T2 tiles); G heads (G*Dk lanes) per step.
# ----------------------------------------------------------------------------
def _flash_attn_kernel(q_ref, kt_ref, v_ref, bias_ref, o_ref,
                       m_sc, l_sc, acc_sc, *, dk, g):
    ki = pl.program_id(3)

    @pl.when(ki == 0)
    def _init():
        m_sc[...] = jnp.full(m_sc.shape, _NEG_INF, jnp.float32)
        l_sc[...] = jnp.zeros(l_sc.shape, jnp.float32)
        acc_sc[...] = jnp.zeros(acc_sc.shape, jnp.float32)

    # one mask-bias load/cast per (qi, ki) tile, shared by all heads in group
    bias = bias_ref[0].astype(jnp.float32)           # ({1|tq}, tk)

    # bounded unroll over the heads of this group (g*dk == 128 typically)
    for gi in range(g):
        lo = gi * dk
        qh = q_ref[0, :, lo:lo + dk]                  # (tq, dk) bf16
        kh = kt_ref[0, lo:lo + dk, :]                 # (dk, tk) bf16 (no xpose)
        vh = v_ref[0, :, lo:lo + dk]                  # (tk, dk) bf16

        s = jnp.dot(qh, kh, preferred_element_type=jnp.float32) + bias

        m_prev = m_sc[gi]                             # (tq, 1)
        m_new = jnp.maximum(m_prev, jnp.max(s, axis=-1, keepdims=True))
        alpha = jnp.exp(m_prev - m_new)
        p = jnp.exp(s - m_new)                        # masked cols underflow to 0

        l_sc[gi] = alpha * l_sc[gi] + jnp.sum(p, axis=-1, keepdims=True)
        acc_sc[:, lo:lo + dk] = alpha * acc_sc[:, lo:lo + dk] + jnp.dot(
            p.astype(jnp.bfloat16), vh, preferred_element_type=jnp.float32)
        m_sc[gi] = m_new

    @pl.when(ki == pl.num_programs(3) - 1)
    def _finalize():
        for gi in range(g):
            lo = gi * dk
            l = l_sc[gi]
            valid = m_sc[gi] > _ROW_VALID_THRESH      # False => fully masked
            inv = jnp.where(
                valid,
                pl.reciprocal(jnp.where(l > 0.0, l, 1.0), approx=True),
                0.0)
            o_ref[0, :, lo:lo + dk] = (acc_sc[:, lo:lo + dk]
                                       * inv).astype(o_ref.dtype)


def flash_attention(q, kt, v, bias, *, n_head, d_k,
                    tq_target=256, tk_target=512):
    B, T1, D = q.shape
    T2 = v.shape[1]
    assert D == n_head * d_k
    G = _pick_head_group(n_head, d_k)
    W = G * d_k
    HG = n_head // G
    tq = _pick_tile(T1, tq_target, 16)
    tk = _pick_tile(T2, tk_target, 128)
    Rm = bias.shape[1]
    assert Rm in (1, T1)
    if Rm == 1:
        rm_blk = 1
        bias_map = lambda b, hg, qi, ki: (b, 0, ki)
    else:
        rm_blk = tq
        bias_map = lambda b, hg, qi, ki: (b, qi, ki)
    grid = (B, HG, T1 // tq, T2 // tk)

    # TODO(synk): a fully-masked-tile skip (pl.when on an any-keep scalar)
    # would save work for long padding runs; omitted for robustness.
    return pl.pallas_call(
        functools.partial(_flash_attn_kernel, dk=d_k, g=G),
        out_shape=jax.ShapeDtypeStruct((B, T1, D), jnp.bfloat16),
        grid_spec=pltpu.PrefetchScalarGridSpec(
            num_scalar_prefetch=0,
            grid=grid,
            in_specs=[
                pl.BlockSpec((1, tq, W), lambda b, hg, qi, ki: (b, qi, hg)),
                pl.BlockSpec((1, W, tk), lambda b, hg, qi, ki: (b, hg, ki)),
                pl.BlockSpec((1, tk, W), lambda b, hg, qi, ki: (b, ki, hg)),
                pl.BlockSpec((1, rm_blk, tk), bias_map),
            ],
            out_specs=pl.BlockSpec((1, tq, W),
                                   lambda b, hg, qi, ki: (b, qi, hg)),
            scratch_shapes=[
                pltpu.VMEM((G, tq, 1), jnp.float32),   # running max per head
                pltpu.VMEM((G, tq, 1), jnp.float32),   # running sum per head
                pltpu.VMEM((tq, W), jnp.float32),      # output accumulator
            ],
        ),
        compiler_params=pltpu.CompilerParams(
            dimension_semantics=("parallel", "parallel", "parallel",
                                 "arbitrary")),
        cost_estimate=pl.CostEstimate(
            flops=4 * B * n_head * T1 * T2 * d_k,
            transcendentals=B * n_head * T1 * T2,
            bytes_accessed=int((q.size + kt.size + v.size) * 2
                               + bias.size * 2 + B * T1 * D * 2)),
    )(q, kt, v, bias)


# ----------------------------------------------------------------------------
# Module wrapper
# ----------------------------------------------------------------------------
class MultiHeadedAttentionPallas:
    """Standard MHA forward (n_kv_head=None, head_dim=None, eval semantics)."""

    def __init__(self, n_head, n_feat, dropout_rate=0.0, key=None):
        assert n_feat % n_head == 0
        self.h = n_head
        self.d_k = n_feat // n_head
        self.inner_dim = n_feat
        self.n_feat = n_feat
        self.dropout_rate = dropout_rate
        # TODO(synk): dropout, KV-cache concat and GQA/MQA (n_kv_head/head_dim)
        # paths are not implemented; this is the standard-MHA eval forward.

        key = key if key is not None else jax.random.PRNGKey(0)
        ks = jax.random.split(key, 8)
        bound = 1.0 / math.sqrt(n_feat)

        def u(k, shape):
            return jax.random.uniform(k, shape, jnp.float32, -bound, bound)

        # Weights stored (in, out) so kernels compute x @ W.  Porting real
        # torch nn.Linear weights requires transposing their (out, in) layout.
        wq, bq = u(ks[0], (n_feat, n_feat)), u(ks[1], (1, n_feat))
        wk, bk = u(ks[2], (n_feat, n_feat)), u(ks[3], (1, n_feat))
        wv, bv = u(ks[4], (n_feat, n_feat)), u(ks[5], (1, n_feat))
        wo, bo = u(ks[6], (n_feat, n_feat)), u(ks[7], (1, n_feat))

        # 1/sqrt(d_k) score scaling is folded into the query projection
        # (mathematically identical to dividing the scores).
        scale = 1.0 / math.sqrt(self.d_k)
        self.w_q = (wq * scale).astype(jnp.bfloat16)
        self.b_q = bq * scale
        self.w_k = wk.astype(jnp.bfloat16)
        self.b_k = bk
        self.w_v = wv.astype(jnp.bfloat16)
        self.b_v = bv
        self.w_o = wo.astype(jnp.bfloat16)
        self.b_o = bo

        self.w_qkv = jnp.stack([self.w_q, self.w_k, self.w_v])  # (3, F, D) bf16
        self.b_qkv = jnp.stack([self.b_q, self.b_k, self.b_v])  # (3, 1, D) f32
        self.w_kv = jnp.stack([self.w_k, self.w_v])              # (2, F, D)
        self.b_kv = jnp.stack([self.b_k, self.b_v])              # (2, 1, D)

    def __call__(self, query, key, value, mask=None):
        B, T1, F = query.shape
        T2 = key.shape[1]
        D = self.inner_dim

        # cast activations once in the wrapper (halves repeated x DMA)
        qb = query.astype(jnp.bfloat16)
        kb = key.astype(jnp.bfloat16)
        vb = value.astype(jnp.bfloat16)

        # NOTE: identity-based dispatch; under jit/copies it falls back to the
        # (correct) separate-projection path.
        if (query is key) and (key is value):
            q3, kt3, v3 = fused_projection(
                qb, self.w_qkv, self.b_qkv, transposed=(False, True, False))
        else:
            q3 = pallas_linear(qb.reshape(B * T1, F), self.w_q,
                               self.b_q).reshape(B, T1, D)
            if key is value:
                kt3, v3 = fused_projection(
                    kb, self.w_kv, self.b_kv, transposed=(True, False))
            else:
                kt3, = fused_projection(kb, self.w_k[None], self.b_k[None],
                                        transposed=(True,))
                v3, = fused_projection(vb, self.w_v[None], self.b_v[None],
                                       transposed=(False,))

        # mask -> small additive bf16 bias (no (T1,T2) f32 blow-up in HBM)
        if mask is None or mask.shape[-1] == 0:
            bias = jnp.zeros((B, 1, T2), jnp.bfloat16)
        else:
            m = mask[..., :T2]
            m = jnp.broadcast_to(m, (B,) + m.shape[1:])
            bias = jnp.where(m != 0, 0.0, _NEG_INF).astype(jnp.bfloat16)

        ctx = flash_attention(q3, kt3, v3, bias,
                              n_head=self.h, d_k=self.d_k)   # (B, T1, D) bf16
        out = pallas_linear(ctx.reshape(B * T1, D), self.w_o, self.b_o,
                            out_dtype=jnp.float32)           # K = H*Dk deep
        return out.reshape(B, T1, F)


# ----------------------------------------------------------------------------
# Pure-JAX reference mirroring the same bf16/f32 recipe (torch forward math;
# 1/sqrt(d_k) is pre-folded into w_q/b_q so no extra divide here).
# ----------------------------------------------------------------------------
def reference(module, query, key, value, mask):
    B, T1, F = query.shape
    T2 = key.shape[1]
    H, Dk = module.h, module.d_k

    def lin(x, w, b):
        y = jnp.dot(x.reshape(-1, F).astype(jnp.bfloat16), w,
                    preferred_element_type=jnp.float32) + b
        return (y.astype(jnp.bfloat16)
                .reshape(x.shape[0], -1, H, Dk).transpose(0, 2, 1, 3))

    q = lin(query, module.w_q, module.b_q)     # (B, H, T1, Dk) bf16
    k = lin(key, module.w_k, module.b_k)
    v = lin(value, module.w_v, module.b_v)

    scores = jnp.einsum("bhqd,bhkd->bhqk", q, k,
                        preferred_element_type=jnp.float32)
    if mask is not None and mask.shape[-1] > 0:
        keep = (mask[..., :T2] != 0)[:, None, :, :]
        scores = jnp.where(keep, scores, -jnp.inf)
        attn = jax.nn.softmax(scores, axis=-1)
        attn = jnp.where(keep, attn, 0.0)
        attn = jnp.where(jnp.isnan(attn), 0.0, attn)
    else:
        attn = jax.nn.softmax(scores, axis=-1)
    ctx = jnp.einsum("bhqk,bhkd->bhqd", attn.astype(jnp.bfloat16), v,
                     preferred_element_type=jnp.float32).astype(jnp.bfloat16)
    ctx = ctx.transpose(0, 2, 1, 3).reshape(B, T1, H * Dk)
    return jnp.dot(ctx, module.w_o,
                   preferred_element_type=jnp.float32) + module.b_o


if __name__ == "__main__":
    n_head, n_feat = 4, 256          # d_k = 64 -> head-group G = 2
    B, T1 = 2, 16

    root = jax.random.PRNGKey(0)
    kx, kkv, kp = jax.random.split(root, 3)
    x = jax.random.normal(kx, (B, T1, n_feat), jnp.float32)

    mha = MultiHeadedAttentionPallas(n_head, n_feat, dropout_rate=0.0, key=kp)

    # 1) self-attention (fused QKV), padding mask (#batch, 1, time)
    mask1 = jnp.ones((B, 1, T1), bool).at[1, 0, T1 - 3:].set(False)
    out1 = mha(x, x, x, mask1)
    jax.block_until_ready(out1)
    ref1 = reference(mha, x, x, x, mask1)
    assert out1.shape == (B, T1, n_feat)
    err1 = float(jnp.max(jnp.abs(out1 - ref1)))
    assert jnp.allclose(out1, ref1, atol=3e-2, rtol=3e-2), \
        f"self-attention mismatch vs reference: {err1}"

    # 2) cross-attention (separate Q, fused K/V), different key length, no mask
    T2 = 24
    kv = jax.random.normal(kkv, (B, T2, n_feat), jnp.float32)
    out2 = mha(x, kv, kv, None)
    jax.block_until_ready(out2)
    ref2 = reference(mha, x, kv, kv, None)
    assert out2.shape == (B, T1, n_feat)
    err2 = float(jnp.max(jnp.abs(out2 - ref2)))
    assert jnp.allclose(out2, ref2, atol=3e-2, rtol=3e-2), \
        f"cross-attention mismatch vs reference: {err2}"

    # 3) self-attention with a (#batch, T, T) mask including a fully-masked row
    mask3 = jnp.ones((B, T1, T1), bool)
    mask3 = mask3.at[0, 0, :].set(False)          # fully-masked query row
    mask3 = mask3.at[1, :, T1 - 5:].set(False)    # partial key padding
    out3 = mha(x, x, x, mask3)
    jax.block_until_ready(out3)
    ref3 = reference(mha, x, x, x, mask3)
    err3 = float(jnp.max(jnp.abs(out3 - ref3)))
    assert jnp.allclose(out3, ref3, atol=3e-2, rtol=3e-2), \
        f"full-mask self-attention mismatch vs reference: {err3}"

    print("KERNEL_OK")
</pallas_src>

<mosaic_0001>
module attributes {stable_mosaic.version = 11 : i64} {
  func.func @_fused_proj_kernel(%arg0: i32, %arg1: i32, %arg2: i32, %arg3: i32, %arg4: memref<1x16x256xbf16, #tpu.memory_space<vmem>>, %arg5: memref<3x256x256xbf16, #tpu.memory_space<vmem>>, %arg6: memref<3x1x256xf32, #tpu.memory_space<vmem>>, %arg7: memref<1x16x256xbf16, #tpu.memory_space<vmem>>, %arg8: memref<1x256x16xbf16, #tpu.memory_space<vmem>>, %arg9: memref<1x16x256xbf16, #tpu.memory_space<vmem>>, %arg10: memref<16x256xf32, #tpu.memory_space<vmem>>, %arg11: memref<16x256xf32, #tpu.memory_space<vmem>>, %arg12: memref<16x256xf32, #tpu.memory_space<vmem>>) attributes {dimension_semantics = [#tpu.dimension_semantics<parallel>, #tpu.dimension_semantics<parallel>, #tpu.dimension_semantics<parallel>, #tpu.dimension_semantics<arbitrary>], iteration_bounds = array<i64: 2, 1, 1, 1>, scalar_prefetch = 0 : i64, scratch_operands = 3 : i64, tpu.core_type = #tpu.core_type<tc>, window_params = [{transform_indices = @transform_0, window_bounds = array<i64: 1, 16, 256>}, {transform_indices = @transform_1, window_bounds = array<i64: 3, 256, 256>}, {transform_indices = @transform_2, window_bounds = array<i64: 3, 1, 256>}, {transform_indices = @transform_3, window_bounds = array<i64: 1, 16, 256>}, {transform_indices = @transform_4, window_bounds = array<i64: 1, 256, 16>}, {transform_indices = @transform_5, window_bounds = array<i64: 1, 16, 256>}]} {
    %c0_i32 = arith.constant 0 : i32
    %0 = arith.cmpi eq, %arg3, %c0_i32 : i32
    %1 = arith.extui %0 : i1 to i32
    %c0_i32_0 = arith.constant 0 : i32
    %2 = arith.cmpi ne, %1, %c0_i32_0 : i32
    scf.if %2 {
      %cst_26 = arith.constant 0.000000e+00 : f32
      %26 = vector.broadcast %cst_26 : f32 to vector<16x256xf32>
      %c0_27 = arith.constant 0 : index
      %c0_28 = arith.constant 0 : index
      %27 = vector.load %arg10[%c0_27, %c0_28] : memref<16x256xf32, #tpu.memory_space<vmem>>, vector<16x256xf32>
      tpu.vector_store %arg10[%c0_27, %c0_28], %26 {strides = array<i32>} : memref<16x256xf32, #tpu.memory_space<vmem>>, vector<16x256xf32>,
      %cst_29 = arith.constant 0.000000e+00 : f32
      %28 = vector.broadcast %cst_29 : f32 to vector<16x256xf32>
      %c0_30 = arith.constant 0 : index
      %c0_31 = arith.constant 0 : index
      %29 = vector.load %arg11[%c0_30, %c0_31] : memref<16x256xf32, #tpu.memory_space<vmem>>, vector<16x256xf32>
      tpu.vector_store %arg11[%c0_30, %c0_31], %28 {strides = array<i32>} : memref<16x256xf32, #tpu.memory_space<vmem>>, vector<16x256xf32>,
      %cst_32 = arith.constant 0.000000e+00 : f32
      %30 = vector.broadcast %cst_32 : f32 to vector<16x256xf32>
      %c0_33 = arith.constant 0 : index
      %c0_34 = arith.constant 0 : index
      %31 = vector.load %arg12[%c0_33, %c0_34] : memref<16x256xf32, #tpu.memory_space<vmem>>, vector<16x256xf32>
      tpu.vector_store %arg12[%c0_33, %c0_34], %30 {strides = array<i32>} : memref<16x256xf32, #tpu.memory_space<vmem>>, vector<16x256xf32>,
    } else {
    }
    %c0 = arith.constant 0 : index
    %c0_1 = arith.constant 0 : index
    %c0_2 = arith.constant 0 : index
    %3 = vector.load %arg4[%c0, %c0_1, %c0_2] : memref<1x16x256xbf16, #tpu.memory_space<vmem>>, vector<1x16x256xbf16>
    %4 = vector.shape_cast %3 : vector<1x16x256xbf16> to vector<16x256xbf16>
    %c0_3 = arith.constant 0 : index
    %c0_4 = arith.constant 0 : index
    %5 = vector.load %arg10[%c0_3, %c0_4] : memref<16x256xf32, #tpu.memory_space<vmem>>, vector<16x256xf32>
    %c0_5 = arith.constant 0 : index
    %c0_6 = arith.constant 0 : index
    %c0_7 = arith.constant 0 : index
    %6 = vector.load %arg5[%c0_5, %c0_6, %c0_7] : memref<3x256x256xbf16, #tpu.memory_space<vmem>>, vector<1x256x256xbf16>
    %7 = vector.shape_cast %6 : vector<1x256x256xbf16> to vector<256x256xbf16>
    %cst = arith.constant dense<0.000000e+00> : vector<16x256xf32>
    %8 = tpu.matmul %4, %7, %cst {dimension_numbers = #tpu.dot_dimension_numbers<[1], [0], [0], [1], [0, 0, 1, 1], [], []>} : vector<16x256xbf16>, vector<256x256xbf16>, vector<16x256xf32> -> vector<16x256xf32>
    %9 = arith.addf %5, %8 : vector<16x256xf32>
    %c0_8 = arith.constant 0 : index
    %c0_9 = arith.constant 0 : index
    %10 = vector.load %arg10[%c0_8, %c0_9] : memref<16x256xf32, #tpu.memory_space<vmem>>, vector<16x256xf32>
    tpu.vector_store %arg10[%c0_8, %c0_9], %9 {strides = array<i32>} : memref<16x256xf32, #tpu.memory_space<vmem>>, vector<16x256xf32>,
    %c0_10 = arith.constant 0 : index
    %c0_11 = arith.constant 0 : index
    %11 = vector.load %arg11[%c0_10, %c0_11] : memref<16x256xf32, #tpu.memory_space<vmem>>, vector<16x256xf32>
    %c1 = arith.constant 1 : index
    %c0_12 = arith.constant 0 : index
    %c0_13 = arith.constant 0 : index
    %12 = vector.load %arg5[%c1, %c0_12, %c0_13] : memref<3x256x256xbf16, #tpu.memory_space<vmem>>, vector<1x256x256xbf16>
    %13 = vector.shape_cast %12 : vector<1x256x256xbf16> to vector<256x256xbf16>
    %cst_14 = arith.constant dense<0.000000e+00> : vector<16x256xf32>
    %14 = tpu.matmul %4, %13, %cst_14 {dimension_numbers = #tpu.dot_dimension_numbers<[1], [0], [0], [1], [0, 0, 1, 1], [], []>} : vector<16x256xbf16>, vector<256x256xbf16>, vector<16x256xf32> -> vector<16x256xf32>
    %15 = arith.addf %11, %14 : vector<16x256xf32>
    %c0_15 = arith.constant 0 : index
    %c0_16 = arith.constant 0 : index
    %16 = vector.load %arg11[%c0_15, %c0_16] : memref<16x256xf32, #tpu.memory_space<vmem>>, vector<16x256xf32>
    tpu.vector_store %arg11[%c0_15, %c0_16], %15 {strides = array<i32>} : memref<16x256xf32, #tpu.memory_space<vmem>>, vector<16x256xf32>,
    %c0_17 = arith.constant 0 : index
    %c0_18 = arith.constant 0 : index
    %17 = vector.load %arg12[%c0_17, %c0_18] : memref<16x256xf32, #tpu.memory_space<vmem>>, vector<16x256xf32>
    %c2 = arith.constant 2 : index
    %c0_19 = arith.constant 0 : index
    %c0_20 = arith.constant 0 : index
    %18 = vector.load %arg5[%c2, %c0_19, %c0_20] : memref<3x256x256xbf16, #tpu.memory_space<vmem>>, vector<1x256x256xbf16>
    %19 = vector.shape_cast %18 : vector<1x256x256xbf16> to vector<256x256xbf16>
    %cst_21 = arith.constant dense<0.000000e+00> : vector<16x256xf32>
    %20 = tpu.matmul %4, %19, %cst_21 {dimension_numbers = #tpu.dot_dimension_numbers<[1], [0], [0], [1], [0, 0, 1, 1], [], []>} : vector<16x256xbf16>, vector<256x256xbf16>, vector<16x256xf32> -> vector<16x256xf32>
    %21 = arith.addf %17, %20 : vector<16x256xf32>
    %c0_22 = arith.constant 0 : index
    %c0_23 = arith.constant 0 : index
    %22 = vector.load %arg12[%c0_22, %c0_23] : memref<16x256xf32, #tpu.memory_space<vmem>>, vector<16x256xf32>
    tpu.vector_store %arg12[%c0_22, %c0_23], %21 {strides = array<i32>} : memref<16x256xf32, #tpu.memory_space<vmem>>, vector<16x256xf32>,
    %c0_i32_24 = arith.constant 0 : i32
    %23 = arith.cmpi eq, %arg3, %c0_i32_24 : i32
    %24 = arith.extui %23 : i1 to i32
    %c0_i32_25 = arith.constant 0 : i32
    %25 = arith.cmpi ne, %24, %c0_i32_25 : i32
    scf.if %25 {
      %c0_26 = arith.constant 0 : index
      %c0_27 = arith.constant 0 : index
      %26 = vector.load %arg10[%c0_26, %c0_27] : memref<16x256xf32, #tpu.memory_space<vmem>>, vector<16x256xf32>
      %c0_28 = arith.constant 0 : index
      %c0_29 = arith.constant 0 : index
      %c0_30 = arith.constant 0 : index
      %27 = vector.load %arg6[%c0_28, %c0_29, %c0_30] : memref<3x1x256xf32, #tpu.memory_space<vmem>>, vector<1x1x256xf32>
      %28 = vector.shape_cast %27 : vector<1x1x256xf32> to vector<1x256xf32>
      %29 = vector.broadcast %28 : vector<1x256xf32> to vector<16x256xf32>
      %30 = arith.addf %26, %29 : vector<16x256xf32>
      %31 = arith.truncf %30 : vector<16x256xf32> to vector<16x256xbf16>
      %c0_31 = arith.constant 0 : index
      %c0_32 = arith.constant 0 : index
      %c0_33 = arith.constant 0 : index
      %32 = vector.load %arg7[%c0_31, %c0_32, %c0_33] : memref<1x16x256xbf16, #tpu.memory_space<vmem>>, vector<1x16x256xbf16>
      %33 = vector.shape_cast %32 : vector<1x16x256xbf16> to vector<16x256xbf16>
      %34 = vector.shape_cast %31 : vector<16x256xbf16> to vector<1x16x256xbf16>
      tpu.vector_store %arg7[%c0_31, %c0_32, %c0_33], %34 {strides = array<i32>} : memref<1x16x256xbf16, #tpu.memory_space<vmem>>, vector<1x16x256xbf16>,
      %c0_34 = arith.constant 0 : index
      %c0_35 = arith.constant 0 : index
      %35 = vector.load %arg11[%c0_34, %c0_35] : memref<16x256xf32, #tpu.memory_space<vmem>>, vector<16x256xf32>
      %c1_36 = arith.constant 1 : index
      %c0_37 = arith.constant 0 : index
      %c0_38 = arith.constant 0 : index
      %36 = vector.load %arg6[%c1_36, %c0_37, %c0_38] : memref<3x1x256xf32, #tpu.memory_space<vmem>>, vector<1x1x256xf32>
      %37 = vector.shape_cast %36 : vector<1x1x256xf32> to vector<1x256xf32>
      %38 = vector.broadcast %37 : vector<1x256xf32> to vector<16x256xf32>
      %39 = arith.addf %35, %38 : vector<16x256xf32>
      %40 = tpu.transpose %39, [1, 0] : vector<16x256xf32> -> vector<256x16xf32>
      %41 = arith.truncf %40 : vector<256x16xf32> to vector<256x16xbf16>
      %c0_39 = arith.constant 0 : index
      %c0_40 = arith.constant 0 : index
      %c0_41 = arith.constant 0 : index
      %42 = vector.load %arg8[%c0_39, %c0_40, %c0_41] : memref<1x256x16xbf16, #tpu.memory_space<vmem>>, vector<1x256x16xbf16>
      %43 = vector.shape_cast %42 : vector<1x256x16xbf16> to vector<256x16xbf16>
      %44 = vector.shape_cast %41 : vector<256x16xbf16> to vector<1x256x16xbf16>
      tpu.vector_store %arg8[%c0_39, %c0_40, %c0_41], %44 {strides = array<i32>} : memref<1x256x16xbf16, #tpu.memory_space<vmem>>, vector<1x256x16xbf16>,
      %c0_42 = arith.constant 0 : index
      %c0_43 = arith.constant 0 : index
      %45 = vector.load %arg12[%c0_42, %c0_43] : memref<16x256xf32, #tpu.memory_space<vmem>>, vector<16x256xf32>
      %c2_44 = arith.constant 2 : index
      %c0_45 = arith.constant 0 : index
      %c0_46 = arith.constant 0 : index
      %46 = vector.load %arg6[%c2_44, %c0_45, %c0_46] : memref<3x1x256xf32, #tpu.memory_space<vmem>>, vector<1x1x256xf32>
      %47 = vector.shape_cast %46 : vector<1x1x256xf32> to vector<1x256xf32>
      %48 = vector.broadcast %47 : vector<1x256xf32> to vector<16x256xf32>
      %49 = arith.addf %45, %48 : vector<16x256xf32>
      %50 = arith.truncf %49 : vector<16x256xf32> to vector<16x256xbf16>
      %c0_47 = arith.constant 0 : index
      %c0_48 = arith.constant 0 : index
      %c0_49 = arith.constant 0 : index
      %51 = vector.load %arg9[%c0_47, %c0_48, %c0_49] : memref<1x16x256xbf16, #tpu.memory_space<vmem>>, vector<1x16x256xbf16>
      %52 = vector.shape_cast %51 : vector<1x16x256xbf16> to vector<16x256xbf16>
      %53 = vector.shape_cast %50 : vector<16x256xbf16> to vector<1x16x256xbf16>
      tpu.vector_store %arg9[%c0_47, %c0_48, %c0_49], %53 {strides = array<i32>} : memref<1x16x256xbf16, #tpu.memory_space<vmem>>, vector<1x16x256xbf16>,
    } else {
    }
    return
  }
  func.func @transform_0(%arg0: i32, %arg1: i32, %arg2: i32, %arg3: i32) -> (i32, i32, i32) {
    %c0_i32 = arith.constant 0 : i32
    return %arg0, %arg1, %arg3 : i32, i32, i32
  }
  func.func @transform_1(%arg0: i32, %arg1: i32, %arg2: i32, %arg3: i32) -> (i32, i32, i32) {
    %c0_i32 = arith.constant 0 : i32
    %c0_i32_0 = arith.constant 0 : i32
    return %c0_i32, %arg3, %arg2 : i32, i32, i32
  }
  func.func @transform_2(%arg0: i32, %arg1: i32, %arg2: i32, %arg3: i32) -> (i32, i32, i32) {
    %c0_i32 = arith.constant 0 : i32
    %c0_i32_0 = arith.constant 0 : i32
    %c0_i32_1 = arith.constant 0 : i32
    return %c0_i32, %c0_i32_0, %arg2 : i32, i32, i32
  }
  func.func @transform_3(%arg0: i32, %arg1: i32, %arg2: i32, %arg3: i32) -> (i32, i32, i32) {
    %c0_i32 = arith.constant 0 : i32
    return %arg0, %arg1, %arg2 : i32, i32, i32
  }
  func.func @transform_4(%arg0: i32, %arg1: i32, %arg2: i32, %arg3: i32) -> (i32, i32, i32) {
    %c0_i32 = arith.constant 0 : i32
    return %arg0, %arg2, %arg1 : i32, i32, i32
  }
  func.func @transform_5(%arg0: i32, %arg1: i32, %arg2: i32, %arg3: i32) -> (i32, i32, i32) {
    %c0_i32 = arith.constant 0 : i32
    return %arg0, %arg1, %arg2 : i32, i32, i32
  }
}

</mosaic_0001>

<llo_original>
// kernel: tpu_custom_call.1
$region0: #{tpu_custom_call.1}
  #allocation0 [shape = 'u32[]', space=smem, size = 0x4, offset = 0x4, fixed_abs, tag = 'smem constant byte address 0x4 - core index']
  #allocation1 [shape = 'u32[144,128]{1,0:T(1,128)}', space=vmem, size = 0x12000, scoped, tag = 'internal scratch']
  #allocation2 [shape = 'f32[16,256]{1,0:T(8,128)}', space=vmem, size = 0x4000, scoped, tag = 'scratch operand']
  #allocation3 [shape = 'f32[16,256]{1,0:T(8,128)}', space=vmem, size = 0x4000, scoped, tag = 'scratch operand']
  #allocation4 [shape = 'f32[16,256]{1,0:T(8,128)}', space=vmem, size = 0x4000, scoped, tag = 'scratch operand']
  %s0 = inlined_call_operand.hbm [shape: bf16[2,16,256], index: 0, kind: input, shape index: {}]
  %s1 = inlined_call_operand.hbm [shape: bf16[3,256,256], index: 1, kind: input, shape index: {}]
  %s2 = inlined_call_operand.vmem [shape: f32[3,1,256], index: 2, kind: input, shape index: {}]
  %s3 = inlined_call_operand.hbm [shape: bf16[2,16,256], index: 3, kind: output, shape index: {0}]
  %s4 = inlined_call_operand.vmem [shape: bf16[2,256,16], index: 4, kind: output, shape index: {1}]
  %s5 = inlined_call_operand.hbm [shape: bf16[2,16,256], index: 5, kind: output, shape index: {2}]
  %6 = xla_tuple %s3, %s4, %s5
  %s7 = sld [smem:[#allocation0]]
  $region77: #{tpu_custom_call.1} parent=0
    _
  %s9 = ssub.s32 1, %s7
  %s10 = scalar_select 0, %s9, %s7
  $region1: #{tpu_custom_call.1} parent=0
    #allocation5 [shape = 'u8[16384]{0}', space=vmem, size = 0x4000, scoped, tag = 'input window, operand 0']
    #allocation6 [shape = 's32[2]{0}', space=sflag, size = 0x8, scoped, tag = 'scoped memory for tpu_custom_call.1']
    #allocation7 [shape = 's32[2]{0}', space=sflag, size = 0x8, scoped, tag = 'scoped memory for tpu_custom_call.1']
    #allocation8 [shape = 'u8[393216]{0}', space=vmem, size = 0x60000, scoped, tag = 'input window, operand 1, single buffered']
    #allocation9 [shape = 's32[1]{0}', space=sflag, size = 0x4, scoped, tag = 'scoped memory for tpu_custom_call.1']
    #allocation10 [shape = 'u8[16384]{0}', space=vmem, size = 0x4000, scoped, tag = 'output window, operand 0']
    #allocation11 [shape = 'u8[16384]{0}', space=vmem, size = 0x4000, scoped, tag = 'output window, operand 2']
    #allocation12 [shape = 's32[2]{0}', space=sflag, size = 0x8, scoped, tag = 'scoped memory for tpu_custom_call.1']
    %11 = vsyncpa [#allocation6], 0
    %s12 = scalar_lea.sflag [#allocation6], 1
    %13 = vsyncpa %s12, 0
    %14 = vsyncpa [#allocation9], 0
    %15 = vsyncpa [#allocation7], 0
    %s16 = scalar_lea.sflag [#allocation7], 1
    %17 = vsyncpa %s16, 0
    %18 = vsyncpa [#allocation12], 0
    %s19 = scalar_lea.sflag [#allocation12], 1
    %20 = vsyncpa %s19, 0
    loop: start=0, step=1, limit=4
    $region2: #{tpu_custom_call.1} parent=1 // loop_pre_header
      _
    $region3: #{tpu_custom_call.1} parent=1 // loop_header
      %s22 = sphi 0, %s26
      %p23 = scmp.ge.s32.totalorder %s22, 4
      %s29 = sphi 0, %s55
      %s30 = sphi 0, %s51
      %s31 = sphi 0, %s47
      %s32 = sphi 0, %s43
      %s33 = sphi 0, %s29
      %s34 = sphi 0, %s30
      %s35 = sphi 0, %s31
      %s36 = sphi 0, %s32
      %s37 = sphi 0, %s33
      %s38 = sphi 0, %s34
      %s39 = sphi 0, %s35
      %s40 = sphi 0, %s36
      %s62 = sphi 0, %s64
      %s65 = sphi 0, %s62
      %s66 = sphi 0, %s65
      %s82 = sphi 0, %s66
      %s90 = sphi 0, %s92
      %s93 = sphi 0, %s90
      %s94 = sphi 0, %s93
      %s110 = sphi 0, %s94
      %s116 = sphi 0, %s118
      %s119 = sphi 0, %s116
      %s120 = sphi 0, %s119
      %s136 = sphi 0, %s120
      %s146 = sphi 0, %s148
      %s149 = sphi 0, %s146
      %s150 = sphi 0, %s149
      %s166 = sphi 0, %s150
      %s176 = sphi 0, %s178
      %s179 = sphi 0, %s176
      %s180 = sphi 0, %s179
      %s196 = sphi 0, %s180
      %s206 = sphi 0, %s208
      %s209 = sphi 0, %s206
      %s210 = sphi 0, %s209
      %s226 = sphi 0, %s210
    $region4: #{tpu_custom_call.1} parent=1 // loop_header_branch
      %25 = sbr.rel (%p23) target = $region8
    $region5: #{tpu_custom_call.1} parent=1 // loop_body
      %s27 = ssub.s32 %s22, 1
      %s28 = ssub.s32 %s22, 2
      %s41 = sadd.s32 1, %s32
      %p42 = scmp.ge.s32.totalorder %s41, 1
      %s43 = scalar_select %p42, 0, %s41
      %s44 = sadd.s32 1, %s31
      %s45 = scalar_select %p42, %s44, %s31
      %p46 = scmp.ge.s32.totalorder %s45, 1
      %s47 = scalar_select %p46, 0, %s45
      %s48 = sadd.s32 1, %s30
      %s49 = scalar_select %p46, %s48, %s30
      %p50 = scmp.ge.s32.totalorder %s49, 1
      %s51 = scalar_select %p50, 0, %s49
      %s52 = sadd.s32 1, %s29
      %s53 = scalar_select %p50, %s52, %s29
      %p54 = scmp.ge.s32.totalorder %s53, 2
      %s55 = scalar_select %p54, 0, %s53
      %s56 = ssub.s32 %s29, %s55
      %s57 = ssub.s32 %s30, %s51
      %s58 = sor.u32 %s56, %s57
      %s59 = ssub.s32 %s32, %s43
      %s60 = sor.u32 %s58, %s59
      %p61 = scmp.eq.s32.totalorder %s60, 0
      %s63 = sadd.s32 %s62, 1
      %s64 = scalar_select %p61, %s62, %s63
      %p67 = pneg %p61
      %p68 = scmp.eq.s32.totalorder %s22, 1
      %p69 = por %p67, %p68
      %p70 = scmp.ne.s32.totalorder %s62, %s65
      %p71 = scmp.eq.s32.totalorder %s22, 0
      %p72 = por %p70, %p71
      %p73 = scmp.ne.s32.totalorder %s62, %s65
      %p74 = scmp.eq.s32.totalorder %s27, 1
      %p75 = por %p73, %p74
      %p76 = scmp.ne.s32.totalorder %s65, %s66
      %p77 = scmp.eq.s32.totalorder %s27, 0
      %p78 = por %p76, %p77
      %p79 = scmp.ne.s32.totalorder %s65, %s66
      %p80 = scmp.eq.s32.totalorder %s28, 1
      %p81 = por %p79, %p80
      %p83 = scmp.ne.s32.totalorder %s66, %s82
      %p84 = scmp.eq.s32.totalorder %s28, 0
      %p85 = por %p83, %p84
      %s86 = ssub.s32 %s32, %s43
      %s87 = ssub.s32 %s31, %s47
      %s88 = sor.u32 %s86, %s87
      %p89 = scmp.eq.s32.totalorder %s88, 0
      %s91 = sadd.s32 %s90, 1
      %s92 = scalar_select %p89, %s90, %s91
      %p95 = pneg %p89
      %p96 = scmp.eq.s32.totalorder %s22, 1
      %p97 = por %p95, %p96
      %p98 = scmp.ne.s32.totalorder %s90, %s93
      %p99 = scmp.eq.s32.totalorder %s22, 0
      %p100 = por %p98, %p99
      %p101 = scmp.ne.s32.totalorder %s90, %s93
      %p102 = scmp.eq.s32.totalorder %s27, 1
      %p103 = por %p101, %p102
      %p104 = scmp.ne.s32.totalorder %s93, %s94
      %p105 = scmp.eq.s32.totalorder %s27, 0
      %p106 = por %p104, %p105
      %p107 = scmp.ne.s32.totalorder %s93, %s94
      %p108 = scmp.eq.s32.totalorder %s28, 1
      %p109 = por %p107, %p108
      %p111 = scmp.ne.s32.totalorder %s94, %s110
      %p112 = scmp.eq.s32.totalorder %s28, 0
      %p113 = por %p111, %p112
      %s114 = ssub.s32 %s31, %s47
      %p115 = scmp.eq.s32.totalorder %s114, 0
      %s117 = sadd.s32 %s116, 1
      %s118 = scalar_select %p115, %s116, %s117
      %p121 = pneg %p115
      %p122 = scmp.eq.s32.totalorder %s22, 1
      %p123 = por %p121, %p122
      %p124 = scmp.ne.s32.totalorder %s116, %s119
      %p125 = scmp.eq.s32.totalorder %s22, 0
      %p126 = por %p124, %p125
      %p127 = scmp.ne.s32.totalorder %s116, %s119
      %p128 = scmp.eq.s32.totalorder %s27, 1
      %p129 = por %p127, %p128
      %p130 = scmp.ne.s32.totalorder %s119, %s120
      %p131 = scmp.eq.s32.totalorder %s27, 0
      %p132 = por %p130, %p131
      %p133 = scmp.ne.s32.totalorder %s119, %s120
      %p134 = scmp.eq.s32.totalorder %s28, 1
      %p135 = por %p133, %p134
      %p137 = scmp.ne.s32.totalorder %s120, %s136
      %p138 = scmp.eq.s32.totalorder %s28, 0
      %p139 = por %p137, %p138
      %s140 = ssub.s32 %s29, %s55
      %s141 = ssub.s32 %s30, %s51
      %s142 = sor.u32 %s140, %s141
      %s143 = ssub.s32 %s31, %s47
      %s144 = sor.u32 %s142, %s143
      %p145 = scmp.eq.s32.totalorder %s144, 0
      %s147 = sadd.s32 %s146, 1
      %s148 = scalar_select %p145, %s146, %s147
      %p151 = pneg %p145
      %p152 = scmp.eq.s32.totalorder %s22, 1
      %p153 = por %p151, %p152
      %p154 = scmp.ne.s32.totalorder %s146, %s149
      %p155 = scmp.eq.s32.totalorder %s22, 0
      %p156 = por %p154, %p155
      %p157 = scmp.ne.s32.totalorder %s146, %s149
      %p158 = scmp.eq.s32.totalorder %s27, 1
      %p159 = por %p157, %p158
      %p160 = scmp.ne.s32.totalorder %s149, %s150
      %p161 = scmp.eq.s32.totalorder %s27, 0
      %p162 = por %p160, %p161
      %p163 = scmp.ne.s32.totalorder %s149, %s150
      %p164 = scmp.eq.s32.totalorder %s28, 1
      %p165 = por %p163, %p164
      %p167 = scmp.ne.s32.totalorder %s150, %s166
      %p168 = scmp.eq.s32.totalorder %s28, 0
      %p169 = por %p167, %p168
      %s170 = ssub.s32 %s29, %s55
      %s171 = ssub.s32 %s31, %s47
      %s172 = sor.u32 %s170, %s171
      %s173 = ssub.s32 %s30, %s51
      %s174 = sor.u32 %s172, %s173
      %p175 = scmp.eq.s32.totalorder %s174, 0
      %s177 = sadd.s32 %s176, 1
      %s178 = scalar_select %p175, %s176, %s177
      %p181 = pneg %p175
      %p182 = scmp.eq.s32.totalorder %s22, 1
      %p183 = por %p181, %p182
      %p184 = scmp.ne.s32.totalorder %s176, %s179
      %p185 = scmp.eq.s32.totalorder %s22, 0
      %p186 = por %p184, %p185
      %p187 = scmp.ne.s32.totalorder %s176, %s179
      %p188 = scmp.eq.s32.totalorder %s27, 1
      %p189 = por %p187, %p188
      %p190 = scmp.ne.s32.totalorder %s179, %s180
      %p191 = scmp.eq.s32.totalorder %s27, 0
      %p192 = por %p190, %p191
      %p193 = scmp.ne.s32.totalorder %s179, %s180
      %p194 = scmp.eq.s32.totalorder %s28, 1
      %p195 = por %p193, %p194
      %p197 = scmp.ne.s32.totalorder %s180, %s196
      %p198 = scmp.eq.s32.totalorder %s28, 0
      %p199 = por %p197, %p198
      %s200 = ssub.s32 %s29, %s55
      %s201 = ssub.s32 %s30, %s51
      %s202 = sor.u32 %s200, %s201
      %s203 = ssub.s32 %s31, %s47
      %s204 = sor.u32 %s202, %s203
      %p205 = scmp.eq.s32.totalorder %s204, 0
      %s207 = sadd.s32 %s206, 1
      %s208 = scalar_select %p205, %s206, %s207
      %p211 = pneg %p205
      %p212 = scmp.eq.s32.totalorder %s22, 1
      %p213 = por %p211, %p212
      %p214 = scmp.ne.s32.totalorder %s206, %s209
      %p215 = scmp.eq.s32.totalorder %s22, 0
      %p216 = por %p214, %p215
      %p217 = scmp.ne.s32.totalorder %s206, %s209
      %p218 = scmp.eq.s32.totalorder %s27, 1
      %p219 = por %p217, %p218
      %p220 = scmp.ne.s32.totalorder %s209, %s210
      %p221 = scmp.eq.s32.totalorder %s27, 0
      %p222 = por %p220, %p221
      %p223 = scmp.ne.s32.totalorder %s209, %s210
      %p224 = scmp.eq.s32.totalorder %s28, 1
      %p225 = por %p223, %p224
      %p227 = scmp.ne.s32.totalorder %s210, %s226
      %p228 = scmp.eq.s32.totalorder %s28, 0
      %p229 = por %p227, %p228
      %p230 = scmp.le.s32.totalorder 1, %s22
      %p231 = scmp.lt.s32.totalorder %s22, 3
      %p232 = pnand %p230, %p231
      %p233 = pneg %p232
      // Predicated region
      $region9: #{tpu_custom_call.1} parent=5 // pred_check
        _
      $region10: #{tpu_custom_call.1} parent=5 // pred_check_branch
        %235 = sbr.rel (%p232) target = $region12
      $region11: #{tpu_custom_call.1} parent=5 // pred_region
        %s236 = ssub.s32 %s22, 1
        // Predicated region
        $region13: #{tpu_custom_call.1} parent=11 // pred_check
          %p237 = pneg %p106
        $region14: #{tpu_custom_call.1} parent=11 // pred_check_branch
          %239 = sbr.rel (%p237) target = $region16
        $region15: #{tpu_custom_call.1} parent=11 // pred_region
          %s240 = smul.u32 32, %s36
          %s241 = smul.u32 2, %s35
          %s243 = ssub.s32 12288, 12288
          %244 = vsyncadd [#allocation9], %s243
          %s245 = smul.addr %s240, 2
          %s246 = sadd.s32 %s241, %s245
          %s247 = smul.addr %s246, 64
          %s248 = scalar_lea.hbm %s1, %s247
          %s249 = sshll.u32 [#allocation8], 4
          %s250 = int_to_ptr.vmem [resolvable:$true] %s249
          %255 = dma.hbm_to_vmem [thread:$0]  %s248, 12288, %s250, [#allocation9], 128, 128, 8
        $region16: #{tpu_custom_call.1} parent=11 // pred_fallthru
          _
        // Predicated region
        $region17: #{tpu_custom_call.1} parent=11 // pred_check
          %p256 = pneg %p132
        $region18: #{tpu_custom_call.1} parent=11 // pred_check_branch
          %258 = sbr.rel (%p256) target = $region20
        $region19: #{tpu_custom_call.1} parent=11 // pred_region
          %s259 = smul.u32 2, %s35
          %p260 = scmp.lt.s32.totalorder %s259, 1
          %s261 = scalar_select %p260, %s259, 1
          %s262 = scalar_lea.vmem %s2, %s261
          %s263 = smul.u32 2, %s35
        $region20: #{tpu_custom_call.1} parent=11 // pred_fallthru
          _
      $region12: #{tpu_custom_call.1} parent=5 // pred_fallthru
        _
      %p264 = scmp.lt.s32.totalorder %s22, 2
      // Predicated region
      $region21: #{tpu_custom_call.1} parent=5 // pred_check
        %p265 = pneg %p264
      $region22: #{tpu_custom_call.1} parent=5 // pred_check_branch
        %267 = sbr.rel (%p265) target = $region24
      $region23: #{tpu_custom_call.1} parent=5 // pred_region
        // Predicated region
        $region25: #{tpu_custom_call.1} parent=23 // pred_check
          %p268 = pneg %p72
        $region26: #{tpu_custom_call.1} parent=23 // pred_check_branch
          %270 = sbr.rel (%p268) target = $region28
        $region27: #{tpu_custom_call.1} parent=23 // pred_region
          %s271 = sand.u32 %s62, 1
          %s272 = scalar_lea.sflag [#allocation6], %s271
          %s273 = sand.u32 %s62, 1
          %s274 = smul.addr %s273, 16
          %s275 = scalar_lea.vmem [#allocation5], %s274
          %s276 = smul.u32 2, %s30
          %s277 = smul.u32 2, %s32
          %s279 = ssub.s32 256, 256
          %280 = vsyncadd %s272, %s279
          %s281 = smul.addr %s276, 2
          %s282 = sadd.s32 %s277, %s281
          %s283 = smul.addr %s29, 4
          %s284 = sadd.s32 %s282, %s283
          %s285 = smul.addr %s284, 64
          %s286 = scalar_lea.hbm %s0, %s285
          %s287 = sshll.u32 %s275, 4
          %s288 = int_to_ptr.vmem [resolvable:$true] %s287
          %293 = dma.hbm_to_vmem [thread:$0]  %s286, 256, %s288, %s272, 128, 128, 8
        $region28: #{tpu_custom_call.1} parent=23 // pred_fallthru
          _
      $region24: #{tpu_custom_call.1} parent=5 // pred_fallthru
        _
      %p294 = scmp.le.s32.totalorder 1, %s22
      %p295 = scmp.lt.s32.totalorder %s22, 3
      %p296 = pnand %p294, %p295
      %p297 = pneg %p296
      // Predicated region
      $region29: #{tpu_custom_call.1} parent=5 // pred_check
        _
      $region30: #{tpu_custom_call.1} parent=5 // pred_check_branch
        %299 = sbr.rel (%p296) target = $region32
      $region31: #{tpu_custom_call.1} parent=5 // pred_region
        %s300 = ssub.s32 %s22, 1
        %s301 = sand.u32 %s65, 1
        %s302 = scalar_lea.sflag [#allocation6], %s301
        %s303 = sand.u32 %s65, 1
        %s304 = smul.addr %s303, 16
        %s305 = scalar_lea.vmem [#allocation5], %s304
        // Predicated region
        $region33: #{tpu_custom_call.1} parent=31 // pred_check
          %p306 = pneg %p78
        $region34: #{tpu_custom_call.1} parent=31 // pred_check_branch
          %308 = sbr.rel (%p306) target = $region36
        $region35: #{tpu_custom_call.1} parent=31 // pred_region
          %309 = dma.done %s302, 256
        $region36: #{tpu_custom_call.1} parent=31 // pred_fallthru
          _
        // Predicated region
        $region37: #{tpu_custom_call.1} parent=31 // pred_check
          %p310 = pneg %p106
        $region38: #{tpu_custom_call.1} parent=31 // pred_check_branch
          %312 = sbr.rel (%p310) target = $region40
        $region39: #{tpu_custom_call.1} parent=31 // pred_region
          %313 = dma.done [#allocation9], 12288
        $region40: #{tpu_custom_call.1} parent=31 // pred_fallthru
          _
        %s314 = sand.u32 %s65, 1
        %s315 = scalar_lea.sflag [#allocation6], %s314
        %s316 = sand.u32 %s65, 1
        %s317 = smul.addr %s316, 16
        %s318 = scalar_lea.vmem [#allocation5], %s317
        %p319 = pneg %p78
        %p320 = pneg %p75
        %p321 = pneg %p106
        %p322 = pneg %p103
        %s323 = smul.u32 2, %s35
        %p324 = scmp.lt.s32.totalorder %s323, 1
        %s325 = scalar_select %p324, %s323, 1
        %s326 = scalar_lea.vmem %s2, %s325
        %p327 = pneg %p132
        %p328 = pneg %p129
        %p329 = pneg %p162
        %p330 = pneg %p159
        %s331 = sand.u32 %s149, 1
        %s332 = scalar_lea.sflag [#allocation7], %s331
        %s333 = sand.u32 %s149, 1
        %s334 = smul.addr %s333, 16
        %s335 = scalar_lea.vmem [#allocation10], %s334
        %p336 = pneg %p192
        %p337 = pneg %p189
        %s338 = smul.u32 32, %s35
        %p339 = scmp.lt.s32.totalorder %s33, 1
        %s340 = scalar_select %p339, %s33, 1
        %p341 = scmp.lt.s32.totalorder %s338, 31
        %s342 = scalar_select %p341, %s338, 31
        %p343 = scmp.lt.s32.totalorder %s34, 0
        %s344 = scalar_select %p343, %s34, 0
        %s345 = sadd.s32 %s344, %s342
        %s346 = smul.addr %s340, 32
        %s347 = sadd.s32 %s345, %s346
        %s348 = smul.addr %s347, 4
        %s349 = scalar_lea.vmem %s4, %s348
        %p350 = pneg %p222
        %p351 = pneg %p219
        %s352 = sand.u32 %s209, 1
        %s353 = scalar_lea.sflag [#allocation12], %s352
        %s354 = sand.u32 %s209, 1
        %s355 = smul.addr %s354, 16
        %s356 = scalar_lea.vmem [#allocation11], %s355
        %s357 = smul.u32 2, %s34
        %s358 = smul.u32 2, %s36
        %s359 = smul.u32 32, %s36
        %s360 = smul.u32 2, %s35
        %s361 = smul.u32 2, %s35
        %p362 = scmp.lt.s32.totalorder %s361, 1
        %s363 = scalar_select %p362, %s361, 1
        %s364 = scalar_lea.vmem %s2, %s363
        %s365 = smul.u32 2, %s35
        %s366 = smul.u32 2, %s34
        %s367 = smul.u32 2, %s35
        %s368 = smul.u32 32, %s35
        %p369 = scmp.lt.s32.totalorder %s33, 1
        %s370 = scalar_select %p369, %s33, 1
        %p371 = scmp.lt.s32.totalorder %s368, 31
        %s372 = scalar_select %p371, %s368, 31
        %p373 = scmp.lt.s32.totalorder %s34, 0
        %s374 = scalar_select %p373, %s34, 0
        %s375 = sadd.s32 %s374, %s372
        %s376 = smul.addr %s370, 32
        %s377 = sadd.s32 %s375, %s376
        %s378 = smul.addr %s377, 4
        %s379 = scalar_lea.vmem %s4, %s378
        %s380 = smul.u32 32, %s35
        %s381 = smul.u32 2, %s34
        %s382 = smul.u32 2, %s35
        %p383 = scmp.eq.s32.totalorder %s36, 0
        // Predicated region
        $region41: #{tpu_custom_call.1} parent=31 // pred_check
          %p384 = pneg %p383
        $region42: #{tpu_custom_call.1} parent=31 // pred_check_branch
          %386 = sbr.rel (%p384) target = $region44
        $region43: #{tpu_custom_call.1} parent=31 // pred_region
          %387 = vst [vmem:[#allocation2] sm:$0xff] 0.0
          %388 = vst [vmem:[#allocation2 + $0x8] sm:$0xff] 0.0
          %389 = vst [vmem:[#allocation2 + $0x10] sm:$0xff] 0.0
          %390 = vst [vmem:[#allocation2 + $0x18] sm:$0xff] 0.0
          %391 = vst [vmem:[#allocation3] sm:$0xff] 0.0
          %392 = vst [vmem:[#allocation3 + $0x8] sm:$0xff] 0.0
          %393 = vst [vmem:[#allocation3 + $0x10] sm:$0xff] 0.0
          %394 = vst [vmem:[#allocation3 + $0x18] sm:$0xff] 0.0
          %395 = vst [vmem:[#allocation4] sm:$0xff] 0.0
          %396 = vst [vmem:[#allocation4 + $0x8] sm:$0xff] 0.0
          %397 = vst [vmem:[#allocation4 + $0x10] sm:$0xff] 0.0
          %398 = vst [vmem:[#allocation4 + $0x18] sm:$0xff] 0.0
        $region44: #{tpu_custom_call.1} parent=31 // pred_fallthru
          _
        %v399 = vld [vmem:[%s305] sm:$0xff]
        %v400 = vld [vmem:[%s305 + $0x8] sm:$0xff]
        %v401 = vld [vmem:[#allocation2] sm:$0xff]
        %v402 = vld [vmem:[#allocation2 + $0x8] sm:$0xff]
        %v403 = vld [vmem:[#allocation2 + $0x10] sm:$0xff]
        %v404 = vld [vmem:[#allocation2 + $0x18] sm:$0xff]
        %v405 = vld [vmem:[#allocation8] sm:$0xff]
        %v406 = vld [vmem:[#allocation8 + $0x8] sm:$0xff]
        %v407 = vld [vmem:[#allocation8 + $0x10] sm:$0xff]
        %v408 = vld [vmem:[#allocation8 + $0x18] sm:$0xff]
        %v409 = vld [vmem:[#allocation8 + $0x20] sm:$0xff]
        %v410 = vld [vmem:[#allocation8 + $0x28] sm:$0xff]
        %v411 = vld [vmem:[#allocation8 + $0x30] sm:$0xff]
        %v412 = vld [vmem:[#allocation8 + $0x38] sm:$0xff]
        %v413 = vld [vmem:[#allocation8 + $0x40] sm:$0xff]
        %v414 = vld [vmem:[#allocation8 + $0x48] sm:$0xff]
        %v415 = vld [vmem:[#allocation8 + $0x50] sm:$0xff]
        %v416 = vld [vmem:[#allocation8 + $0x58] sm:$0xff]
        %v417 = vld [vmem:[#allocation8 + $0x60] sm:$0xff]
        %v418 = vld [vmem:[#allocation8 + $0x68] sm:$0xff]
        %v419 = vld [vmem:[#allocation8 + $0x70] sm:$0xff]
        %v420 = vld [vmem:[#allocation8 + $0x78] sm:$0xff]
        %v421 = vld [vmem:[#allocation8 + $0x80] sm:$0xff]
        %v422 = vld [vmem:[#allocation8 + $0x88] sm:$0xff]
        %v423 = vld [vmem:[#allocation8 + $0x90] sm:$0xff]
        %v424 = vld [vmem:[#allocation8 + $0x98] sm:$0xff]
        %v425 = vld [vmem:[#allocation8 + $0xa0] sm:$0xff]
        %v426 = vld [vmem:[#allocation8 + $0xa8] sm:$0xff]
        %v427 = vld [vmem:[#allocation8 + $0xb0] sm:$0xff]
        %v428 = vld [vmem:[#allocation8 + $0xb8] sm:$0xff]
        %v429 = vld [vmem:[#allocation8 + $0xc0] sm:$0xff]
        %v430 = vld [vmem:[#allocation8 + $0xc8] sm:$0xff]
        %v431 = vld [vmem:[#allocation8 + $0xd0] sm:$0xff]
        %v432 = vld [vmem:[#allocation8 + $0xd8] sm:$0xff]
        %v433 = vld [vmem:[#allocation8 + $0xe0] sm:$0xff]
        %v434 = vld [vmem:[#allocation8 + $0xe8] sm:$0xff]
        %v435 = vld [vmem:[#allocation8 + $0xf0] sm:$0xff]
        %v436 = vld [vmem:[#allocation8 + $0xf8] sm:$0xff]
        %v439 = vunpack.c.l.b16 %v399
        %v440 = vunpack.c.h.b16 %v399
        %v441 = vunpack.c.l.b16 %v400
        %v442 = vunpack.c.h.b16 %v400
        %v443 = vpack.c.b16 %v441, %v439
        %v444 = vpack.c.b16 %v442, %v440
        %v479 = vunpack.c.l.b16 %v405
        %v480 = vunpack.c.h.b16 %v405
        %v481 = vunpack.c.l.b16 %v406
        %v482 = vunpack.c.h.b16 %v406
        %v483 = vunpack.c.l.b16 %v407
        %v484 = vunpack.c.h.b16 %v407
        %v485 = vunpack.c.l.b16 %v408
        %v486 = vunpack.c.h.b16 %v408
        %v487 = vunpack.c.l.b16 %v409
        %v488 = vunpack.c.h.b16 %v409
        %v489 = vunpack.c.l.b16 %v410
        %v490 = vunpack.c.h.b16 %v410
        %v491 = vunpack.c.l.b16 %v411
        %v492 = vunpack.c.h.b16 %v411
        %v493 = vunpack.c.l.b16 %v412
        %v494 = vunpack.c.h.b16 %v412
        %v495 = vunpack.c.l.b16 %v413
        %v496 = vunpack.c.h.b16 %v413
        %v497 = vunpack.c.l.b16 %v414
        %v498 = vunpack.c.h.b16 %v414
        %v499 = vunpack.c.l.b16 %v415
        %v500 = vunpack.c.h.b16 %v415
        %v501 = vunpack.c.l.b16 %v416
        %v502 = vunpack.c.h.b16 %v416
        %v503 = vunpack.c.l.b16 %v417
        %v504 = vunpack.c.h.b16 %v417
        %v505 = vunpack.c.l.b16 %v418
        %v506 = vunpack.c.h.b16 %v418
        %v507 = vunpack.c.l.b16 %v419
        %v508 = vunpack.c.h.b16 %v419
        %v509 = vunpack.c.l.b16 %v420
        %v510 = vunpack.c.h.b16 %v420
        %v511 = vunpack.c.l.b16 %v421
        %v512 = vunpack.c.h.b16 %v421
        %v513 = vunpack.c.l.b16 %v422
        %v514 = vunpack.c.h.b16 %v422
        %v515 = vunpack.c.l.b16 %v423
        %v516 = vunpack.c.h.b16 %v423
        %v517 = vunpack.c.l.b16 %v424
        %v518 = vunpack.c.h.b16 %v424
        %v519 = vunpack.c.l.b16 %v425
        %v520 = vunpack.c.h.b16 %v425
        %v521 = vunpack.c.l.b16 %v426
        %v522 = vunpack.c.h.b16 %v426
        %v523 = vunpack.c.l.b16 %v427
        %v524 = vunpack.c.h.b16 %v427
        %v525 = vunpack.c.l.b16 %v428
        %v526 = vunpack.c.h.b16 %v428
        %v527 = vunpack.c.l.b16 %v429
        %v528 = vunpack.c.h.b16 %v429
        %v529 = vunpack.c.l.b16 %v430
        %v530 = vunpack.c.h.b16 %v430
        %v531 = vunpack.c.l.b16 %v431
        %v532 = vunpack.c.h.b16 %v431
        %v533 = vunpack.c.l.b16 %v432
        %v534 = vunpack.c.h.b16 %v432
        %v535 = vunpack.c.l.b16 %v433
        %v536 = vunpack.c.h.b16 %v433
        %v537 = vunpack.c.l.b16 %v434
        %v538 = vunpack.c.h.b16 %v434
        %v539 = vunpack.c.l.b16 %v435
        %v540 = vunpack.c.h.b16 %v435
        %v541 = vunpack.c.l.b16 %v436
        %v542 = vunpack.c.h.b16 %v436
        %v543 = vpack.c.b16 %v481, %v479
        %v544 = vpack.c.b16 %v482, %v480
        %v545 = vpack.c.b16 %v485, %v483
        %v546 = vpack.c.b16 %v486, %v484
        %v547 = vpack.c.b16 %v489, %v487
        %v548 = vpack.c.b16 %v490, %v488
        %v549 = vpack.c.b16 %v493, %v491
        %v550 = vpack.c.b16 %v494, %v492
        %v551 = vpack.c.b16 %v497, %v495
        %v552 = vpack.c.b16 %v498, %v496
        %v553 = vpack.c.b16 %v501, %v499
        %v554 = vpack.c.b16 %v502, %v500
        %v555 = vpack.c.b16 %v505, %v503
        %v556 = vpack.c.b16 %v506, %v504
        %v557 = vpack.c.b16 %v509, %v507
        %v558 = vpack.c.b16 %v510, %v508
        %v559 = vpack.c.b16 %v513, %v511
        %v560 = vpack.c.b16 %v514, %v512
        %v561 = vpack.c.b16 %v517, %v515
        %v562 = vpack.c.b16 %v518, %v516
        %v563 = vpack.c.b16 %v521, %v519
        %v564 = vpack.c.b16 %v522, %v520
        %v565 = vpack.c.b16 %v525, %v523
        %v566 = vpack.c.b16 %v526, %v524
        %v567 = vpack.c.b16 %v529, %v527
        %v568 = vpack.c.b16 %v530, %v528
        %v569 = vpack.c.b16 %v533, %v531
        %v570 = vpack.c.b16 %v534, %v532
        %v571 = vpack.c.b16 %v537, %v535
        %v572 = vpack.c.b16 %v538, %v536
        %v573 = vpack.c.b16 %v541, %v539
        %v574 = vpack.c.b16 %v542, %v540
        %607 = vmatprep.subr.bf16.mxu0 %v544
        %608 = vmatpush1.bf16.msra.mxu0 %v543
        %609 = vmatprep.subr.bf16.mxu0 %v546
        %610 = vmatpush1.bf16.msra.mxu0 %v545
        %611 = vmatprep.subr.bf16.mxu0 %v548
        %612 = vmatpush1.bf16.msra.mxu0 %v547
        %613 = vmatprep.subr.bf16.mxu0 %v550
        %614 = vmatpush1.bf16.msra.mxu0 %v549
        %615 = vmatprep.subr.bf16.mxu0 %v552
        %616 = vmatpush1.bf16.msra.mxu0 %v551
        %617 = vmatprep.subr.bf16.mxu0 %v554
        %618 = vmatpush1.bf16.msra.mxu0 %v553
        %619 = vmatprep.subr.bf16.mxu0 %v556
        %620 = vmatpush1.bf16.msra.mxu0 %v555
        %621 = vmatprep.subr.bf16.mxu0 %v558
        %622 = vmatpush1.bf16.msra.mxu0 %v557
        %623 = vmatprep.subr.bf16.mxu0 %v560
        %624 = vmatpush1.bf16.msra.mxu0 %v559
        %625 = vmatprep.subr.bf16.mxu0 %v562
        %626 = vmatpush1.bf16.msra.mxu0 %v561
        %627 = vmatprep.subr.bf16.mxu0 %v564
        %628 = vmatpush1.bf16.msra.mxu0 %v563
        %629 = vmatprep.subr.bf16.mxu0 %v566
        %630 = vmatpush1.bf16.msra.mxu0 %v565
        %631 = vmatprep.subr.bf16.mxu0 %v568
        %632 = vmatpush1.bf16.msra.mxu0 %v567
        %633 = vmatprep.subr.bf16.mxu0 %v570
        %634 = vmatpush1.bf16.msra.mxu0 %v569
        %635 = vmatprep.subr.bf16.mxu0 %v572
        %636 = vmatpush1.bf16.msra.mxu0 %v571
        %637 = vmatprep.subr.bf16.mxu0 %v574
        %638 = vmatpush1.bf16.msra.mxu0 %v573
        %639 = vmatprep.mubr.bf16.mxu0 %v444
        %640 = vmatmul.mubr.bf16.gmra.mrb[0].mxu0 %v443
        %v641 = vpop.f32.mrb[0].mxu0
        %v642 = vadd.f32 0.0, %v641
        %v643 = vpop.f32.mrb[0].mxu0
        %v644 = vadd.f32 0.0, %v643
        %v645 = vpop.f32.mrb[0].mxu0
        %v646 = vadd.f32 0.0, %v645
        %v647 = vpop.f32.mrb[0].mxu0
        %v648 = vadd.f32 0.0, %v647
        %649 = vdwg.mxu0
        %v650 = vadd.f32 %v401, %v642
        %v651 = vadd.f32 %v402, %v644
        %v652 = vadd.f32 %v403, %v646
        %v653 = vadd.f32 %v404, %v648
        %654 = vst [vmem:[#allocation2] sm:$0xff] %v650
        %655 = vst [vmem:[#allocation2 + $0x8] sm:$0xff] %v651
        %656 = vst [vmem:[#allocation2 + $0x10] sm:$0xff] %v652
        %657 = vst [vmem:[#allocation2 + $0x18] sm:$0xff] %v653
        %v658 = vld [vmem:[#allocation3] sm:$0xff]
        %v659 = vld [vmem:[#allocation3 + $0x8] sm:$0xff]
        %v660 = vld [vmem:[#allocation3 + $0x10] sm:$0xff]
        %v661 = vld [vmem:[#allocation3 + $0x18] sm:$0xff]
        %s662 = scalar_lea.vmem [#allocation8], 256
        %v663 = vld [vmem:[%s662] sm:$0xff]
        %v664 = vld [vmem:[%s662 + $0x8] sm:$0xff]
        %v665 = vld [vmem:[%s662 + $0x10] sm:$0xff]
        %v666 = vld [vmem:[%s662 + $0x18] sm:$0xff]
        %v667 = vld [vmem:[%s662 + $0x20] sm:$0xff]
        %v668 = vld [vmem:[%s662 + $0x28] sm:$0xff]
        %v669 = vld [vmem:[%s662 + $0x30] sm:$0xff]
        %v670 = vld [vmem:[%s662 + $0x38] sm:$0xff]
        %v671 = vld [vmem:[%s662 + $0x40] sm:$0xff]
        %v672 = vld [vmem:[%s662 + $0x48] sm:$0xff]
        %v673 = vld [vmem:[%s662 + $0x50] sm:$0xff]
        %v674 = vld [vmem:[%s662 + $0x58] sm:$0xff]
        %v675 = vld [vmem:[%s662 + $0x60] sm:$0xff]
        %v676 = vld [vmem:[%s662 + $0x68] sm:$0xff]
        %v677 = vld [vmem:[%s662 + $0x70] sm:$0xff]
        %v678 = vld [vmem:[%s662 + $0x78] sm:$0xff]
        %v679 = vld [vmem:[%s662 + $0x80] sm:$0xff]
        %v680 = vld [vmem:[%s662 + $0x88] sm:$0xff]
        %v681 = vld [vmem:[%s662 + $0x90] sm:$0xff]
        %v682 = vld [vmem:[%s662 + $0x98] sm:$0xff]
        %v683 = vld [vmem:[%s662 + $0xa0] sm:$0xff]
        %v684 = vld [vmem:[%s662 + $0xa8] sm:$0xff]
        %v685 = vld [vmem:[%s662 + $0xb0] sm:$0xff]
        %v686 = vld [vmem:[%s662 + $0xb8] sm:$0xff]
        %v687 = vld [vmem:[%s662 + $0xc0] sm:$0xff]
        %v688 = vld [vmem:[%s662 + $0xc8] sm:$0xff]
        %v689 = vld [vmem:[%s662 + $0xd0] sm:$0xff]
        %v690 = vld [vmem:[%s662 + $0xd8] sm:$0xff]
        %v691 = vld [vmem:[%s662 + $0xe0] sm:$0xff]
        %v692 = vld [vmem:[%s662 + $0xe8] sm:$0xff]
        %v693 = vld [vmem:[%s662 + $0xf0] sm:$0xff]
        %v694 = vld [vmem:[%s662 + $0xf8] sm:$0xff]
        %v727 = vunpack.c.l.b16 %v663
        %v728 = vunpack.c.h.b16 %v663
        %v729 = vunpack.c.l.b16 %v664
        %v730 = vunpack.c.h.b16 %v664
        %v731 = vunpack.c.l.b16 %v665
        %v732 = vunpack.c.h.b16 %v665
        %v733 = vunpack.c.l.b16 %v666
        %v734 = vunpack.c.h.b16 %v666
        %v735 = vunpack.c.l.b16 %v667
        %v736 = vunpack.c.h.b16 %v667
        %v737 = vunpack.c.l.b16 %v668
        %v738 = vunpack.c.h.b16 %v668
        %v739 = vunpack.c.l.b16 %v669
        %v740 = vunpack.c.h.b16 %v669
        %v741 = vunpack.c.l.b16 %v670
        %v742 = vunpack.c.h.b16 %v670
        %v743 = vunpack.c.l.b16 %v671
        %v744 = vunpack.c.h.b16 %v671
        %v745 = vunpack.c.l.b16 %v672
        %v746 = vunpack.c.h.b16 %v672
        %v747 = vunpack.c.l.b16 %v673
        %v748 = vunpack.c.h.b16 %v673
        %v749 = vunpack.c.l.b16 %v674
        %v750 = vunpack.c.h.b16 %v674
        %v751 = vunpack.c.l.b16 %v675
        %v752 = vunpack.c.h.b16 %v675
        %v753 = vunpack.c.l.b16 %v676
        %v754 = vunpack.c.h.b16 %v676
        %v755 = vunpack.c.l.b16 %v677
        %v756 = vunpack.c.h.b16 %v677
        %v757 = vunpack.c.l.b16 %v678
        %v758 = vunpack.c.h.b16 %v678
        %v759 = vunpack.c.l.b16 %v679
        %v760 = vunpack.c.h.b16 %v679
        %v761 = vunpack.c.l.b16 %v680
        %v762 = vunpack.c.h.b16 %v680
        %v763 = vunpack.c.l.b16 %v681
        %v764 = vunpack.c.h.b16 %v681
        %v765 = vunpack.c.l.b16 %v682
        %v766 = vunpack.c.h.b16 %v682
        %v767 = vunpack.c.l.b16 %v683
        %v768 = vunpack.c.h.b16 %v683
        %v769 = vunpack.c.l.b16 %v684
        %v770 = vunpack.c.h.b16 %v684
        %v771 = vunpack.c.l.b16 %v685
        %v772 = vunpack.c.h.b16 %v685
        %v773 = vunpack.c.l.b16 %v686
        %v774 = vunpack.c.h.b16 %v686
        %v775 = vunpack.c.l.b16 %v687
        %v776 = vunpack.c.h.b16 %v687
        %v777 = vunpack.c.l.b16 %v688
        %v778 = vunpack.c.h.b16 %v688
        %v779 = vunpack.c.l.b16 %v689
        %v780 = vunpack.c.h.b16 %v689
        %v781 = vunpack.c.l.b16 %v690
        %v782 = vunpack.c.h.b16 %v690
        %v783 = vunpack.c.l.b16 %v691
        %v784 = vunpack.c.h.b16 %v691
        %v785 = vunpack.c.l.b16 %v692
        %v786 = vunpack.c.h.b16 %v692
        %v787 = vunpack.c.l.b16 %v693
        %v788 = vunpack.c.h.b16 %v693
        %v789 = vunpack.c.l.b16 %v694
        %v790 = vunpack.c.h.b16 %v694
        %v791 = vpack.c.b16 %v729, %v727
        %v792 = vpack.c.b16 %v730, %v728
        %v793 = vpack.c.b16 %v733, %v731
        %v794 = vpack.c.b16 %v734, %v732
        %v795 = vpack.c.b16 %v737, %v735
        %v796 = vpack.c.b16 %v738, %v736
        %v797 = vpack.c.b16 %v741, %v739
        %v798 = vpack.c.b16 %v742, %v740
        %v799 = vpack.c.b16 %v745, %v743
        %v800 = vpack.c.b16 %v746, %v744
        %v801 = vpack.c.b16 %v749, %v747
        %v802 = vpack.c.b16 %v750, %v748
        %v803 = vpack.c.b16 %v753, %v751
        %v804 = vpack.c.b16 %v754, %v752
        %v805 = vpack.c.b16 %v757, %v755
        %v806 = vpack.c.b16 %v758, %v756
        %v807 = vpack.c.b16 %v761, %v759
        %v808 = vpack.c.b16 %v762, %v760
        %v809 = vpack.c.b16 %v765, %v763
        %v810 = vpack.c.b16 %v766, %v764
        %v811 = vpack.c.b16 %v769, %v767
        %v812 = vpack.c.b16 %v770, %v768
        %v813 = vpack.c.b16 %v773, %v771
        %v814 = vpack.c.b16 %v774, %v772
        %v815 = vpack.c.b16 %v777, %v775
        %v816 = vpack.c.b16 %v778, %v776
        %v817 = vpack.c.b16 %v781, %v779
        %v818 = vpack.c.b16 %v782, %v780
        %v819 = vpack.c.b16 %v785, %v783
        %v820 = vpack.c.b16 %v786, %v784
        %v821 = vpack.c.b16 %v789, %v787
        %v822 = vpack.c.b16 %v790, %v788
        %855 = vmatprep.subr.bf16.mxu0 %v792
        %856 = vmatpush1.bf16.msra.mxu0 %v791
        %857 = vmatprep.subr.bf16.mxu0 %v794
        %858 = vmatpush1.bf16.msra.mxu0 %v793
        %859 = vmatprep.subr.bf16.mxu0 %v796
        %860 = vmatpush1.bf16.msra.mxu0 %v795
        %861 = vmatprep.subr.bf16.mxu0 %v798
        %862 = vmatpush1.bf16.msra.mxu0 %v797
        %863 = vmatprep.subr.bf16.mxu0 %v800
        %864 = vmatpush1.bf16.msra.mxu0 %v799
        %865 = vmatprep.subr.bf16.mxu0 %v802
        %866 = vmatpush1.bf16.msra.mxu0 %v801
        %867 = vmatprep.subr.bf16.mxu0 %v804
        %868 = vmatpush1.bf16.msra.mxu0 %v803
        %869 = vmatprep.subr.bf16.mxu0 %v806
        %870 = vmatpush1.bf16.msra.mxu0 %v805
        %871 = vmatprep.subr.bf16.mxu0 %v808
        %872 = vmatpush1.bf16.msra.mxu0 %v807
        %873 = vmatprep.subr.bf16.mxu0 %v810
        %874 = vmatpush1.bf16.msra.mxu0 %v809
        %875 = vmatprep.subr.bf16.mxu0 %v812
        %876 = vmatpush1.bf16.msra.mxu0 %v811
        %877 = vmatprep.subr.bf16.mxu0 %v814
        %878 = vmatpush1.bf16.msra.mxu0 %v813
        %879 = vmatprep.subr.bf16.mxu0 %v816
        %880 = vmatpush1.bf16.msra.mxu0 %v815
        %881 = vmatprep.subr.bf16.mxu0 %v818
        %882 = vmatpush1.bf16.msra.mxu0 %v817
        %883 = vmatprep.subr.bf16.mxu0 %v820
        %884 = vmatpush1.bf16.msra.mxu0 %v819
        %885 = vmatprep.subr.bf16.mxu0 %v822
        %886 = vmatpush1.bf16.msra.mxu0 %v821
        %887 = vmatprep.mubr.bf16.mxu0 %v444
        %888 = vmatmul.mubr.bf16.gmra.mrb[0].mxu0 %v443
        %v889 = vpop.f32.mrb[0].mxu0
        %v890 = vadd.f32 0.0, %v889
        %v891 = vpop.f32.mrb[0].mxu0
        %v892 = vadd.f32 0.0, %v891
        %v893 = vpop.f32.mrb[0].mxu0
        %v894 = vadd.f32 0.0, %v893
        %v895 = vpop.f32.mrb[0].mxu0
        %v896 = vadd.f32 0.0, %v895
        %897 = vdwg.mxu0
        %v898 = vadd.f32 %v658, %v890
        %v899 = vadd.f32 %v659, %v892
        %v900 = vadd.f32 %v660, %v894
        %v901 = vadd.f32 %v661, %v896
        %902 = vst [vmem:[#allocation3] sm:$0xff] %v898
        %903 = vst [vmem:[#allocation3 + $0x8] sm:$0xff] %v899
        %904 = vst [vmem:[#allocation3 + $0x10] sm:$0xff] %v900
        %905 = vst [vmem:[#allocation3 + $0x18] sm:$0xff] %v901
        %v906 = vld [vmem:[#allocation4] sm:$0xff]
        %v907 = vld [vmem:[#allocation4 + $0x8] sm:$0xff]
        %v908 = vld [vmem:[#allocation4 + $0x10] sm:$0xff]
        %v909 = vld [vmem:[#allocation4 + $0x18] sm:$0xff]
        %s910 = scalar_lea.vmem [#allocation8], 512
        %v911 = vld [vmem:[%s910] sm:$0xff]
        %v912 = vld [vmem:[%s910 + $0x8] sm:$0xff]
        %v913 = vld [vmem:[%s910 + $0x10] sm:$0xff]
        %v914 = vld [vmem:[%s910 + $0x18] sm:$0xff]
        %v915 = vld [vmem:[%s910 + $0x20] sm:$0xff]
        %v916 = vld [vmem:[%s910 + $0x28] sm:$0xff]
        %v917 = vld [vmem:[%s910 + $0x30] sm:$0xff]
        %v918 = vld [vmem:[%s910 + $0x38] sm:$0xff]
        %v919 = vld [vmem:[%s910 + $0x40] sm:$0xff]
        %v920 = vld [vmem:[%s910 + $0x48] sm:$0xff]
        %v921 = vld [vmem:[%s910 + $0x50] sm:$0xff]
        %v922 = vld [vmem:[%s910 + $0x58] sm:$0xff]
        %v923 = vld [vmem:[%s910 + $0x60] sm:$0xff]
        %v924 = vld [vmem:[%s910 + $0x68] sm:$0xff]
        %v925 = vld [vmem:[%s910 + $0x70] sm:$0xff]
        %v926 = vld [vmem:[%s910 + $0x78] sm:$0xff]
        %v927 = vld [vmem:[%s910 + $0x80] sm:$0xff]
        %v928 = vld [vmem:[%s910 + $0x88] sm:$0xff]
        %v929 = vld [vmem:[%s910 + $0x90] sm:$0xff]
        %v930 = vld [vmem:[%s910 + $0x98] sm:$0xff]
        %v931 = vld [vmem:[%s910 + $0xa0] sm:$0xff]
        %v932 = vld [vmem:[%s910 + $0xa8] sm:$0xff]
        %v933 = vld [vmem:[%s910 + $0xb0] sm:$0xff]
        %v934 = vld [vmem:[%s910 + $0xb8] sm:$0xff]
        %v935 = vld [vmem:[%s910 + $0xc0] sm:$0xff]
        %v936 = vld [vmem:[%s910 + $0xc8] sm:$0xff]
        %v937 = vld [vmem:[%s910 + $0xd0] sm:$0xff]
        %v938 = vld [vmem:[%s910 + $0xd8] sm:$0xff]
        %v939 = vld [vmem:[%s910 + $0xe0] sm:$0xff]
        %v940 = vld [vmem:[%s910 + $0xe8] sm:$0xff]
        %v941 = vld [vmem:[%s910 + $0xf0] sm:$0xff]
        %v942 = vld [vmem:[%s910 + $0xf8] sm:$0xff]
        %v975 = vunpack.c.l.b16 %v911
        %v976 = vunpack.c.h.b16 %v911
        %v977 = vunpack.c.l.b16 %v912
        %v978 = vunpack.c.h.b16 %v912
        %v979 = vunpack.c.l.b16 %v913
        %v980 = vunpack.c.h.b16 %v913
        %v981 = vunpack.c.l.b16 %v914
        %v982 = vunpack.c.h.b16 %v914
        %v983 = vunpack.c.l.b16 %v915
        %v984 = vunpack.c.h.b16 %v915
        %v985 = vunpack.c.l.b16 %v916
        %v986 = vunpack.c.h.b16 %v916
        %v987 = vunpack.c.l.b16 %v917
        %v988 = vunpack.c.h.b16 %v917
        %v989 = vunpack.c.l.b16 %v918
        %v990 = vunpack.c.h.b16 %v918
        %v991 = vunpack.c.l.b16 %v919
        %v992 = vunpack.c.h.b16 %v919
        %v993 = vunpack.c.l.b16 %v920
        %v994 = vunpack.c.h.b16 %v920
        %v995 = vunpack.c.l.b16 %v921
        %v996 = vunpack.c.h.b16 %v921
        %v997 = vunpack.c.l.b16 %v922
        %v998 = vunpack.c.h.b16 %v922
        %v999 = vunpack.c.l.b16 %v923
        %v1000 = vunpack.c.h.b16 %v923
        %v1001 = vunpack.c.l.b16 %v924
        %v1002 = vunpack.c.h.b16 %v924
        %v1003 = vunpack.c.l.b16 %v925
        %v1004 = vunpack.c.h.b16 %v925
        %v1005 = vunpack.c.l.b16 %v926
        %v1006 = vunpack.c.h.b16 %v926
        %v1007 = vunpack.c.l.b16 %v927
        %v1008 = vunpack.c.h.b16 %v927
        %v1009 = vunpack.c.l.b16 %v928
        %v1010 = vunpack.c.h.b16 %v928
        %v1011 = vunpack.c.l.b16 %v929
        %v1012 = vunpack.c.h.b16 %v929
        %v1013 = vunpack.c.l.b16 %v930
        %v1014 = vunpack.c.h.b16 %v930
        %v1015 = vunpack.c.l.b16 %v931
        %v1016 = vunpack.c.h.b16 %v931
        %v1017 = vunpack.c.l.b16 %v932
        %v1018 = vunpack.c.h.b16 %v932
        %v1019 = vunpack.c.l.b16 %v933
        %v1020 = vunpack.c.h.b16 %v933
        %v1021 = vunpack.c.l.b16 %v934
        %v1022 = vunpack.c.h.b16 %v934
        %v1023 = vunpack.c.l.b16 %v935
        %v1024 = vunpack.c.h.b16 %v935
        %v1025 = vunpack.c.l.b16 %v936
        %v1026 = vunpack.c.h.b16 %v936
        %v1027 = vunpack.c.l.b16 %v937
        %v1028 = vunpack.c.h.b16 %v937
        %v1029 = vunpack.c.l.b16 %v938
        %v1030 = vunpack.c.h.b16 %v938
        %v1031 = vunpack.c.l.b16 %v939
        %v1032 = vunpack.c.h.b16 %v939
        %v1033 = vunpack.c.l.b16 %v940
        %v1034 = vunpack.c.h.b16 %v940
        %v1035 = vunpack.c.l.b16 %v941
        %v1036 = vunpack.c.h.b16 %v941
        %v1037 = vunpack.c.l.b16 %v942
        %v1038 = vunpack.c.h.b16 %v942
        %v1039 = vpack.c.b16 %v977, %v975
        %v1040 = vpack.c.b16 %v978, %v976
        %v1041 = vpack.c.b16 %v981, %v979
        %v1042 = vpack.c.b16 %v982, %v980
        %v1043 = vpack.c.b16 %v985, %v983
        %v1044 = vpack.c.b16 %v986, %v984
        %v1045 = vpack.c.b16 %v989, %v987
        %v1046 = vpack.c.b16 %v990, %v988
        %v1047 = vpack.c.b16 %v993, %v991
        %v1048 = vpack.c.b16 %v994, %v992
        %v1049 = vpack.c.b16 %v997, %v995
        %v1050 = vpack.c.b16 %v998, %v996
        %v1051 = vpack.c.b16 %v1001, %v999
        %v1052 = vpack.c.b16 %v1002, %v1000
        %v1053 = vpack.c.b16 %v1005, %v1003
        %v1054 = vpack.c.b16 %v1006, %v1004
        %v1055 = vpack.c.b16 %v1009, %v1007
        %v1056 = vpack.c.b16 %v1010, %v1008
        %v1057 = vpack.c.b16 %v1013, %v1011
        %v1058 = vpack.c.b16 %v1014, %v1012
        %v1059 = vpack.c.b16 %v1017, %v1015
        %v1060 = vpack.c.b16 %v1018, %v1016
        %v1061 = vpack.c.b16 %v1021, %v1019
        %v1062 = vpack.c.b16 %v1022, %v1020
        %v1063 = vpack.c.b16 %v1025, %v1023
        %v1064 = vpack.c.b16 %v1026, %v1024
        %v1065 = vpack.c.b16 %v1029, %v1027
        %v1066 = vpack.c.b16 %v1030, %v1028
        %v1067 = vpack.c.b16 %v1033, %v1031
        %v1068 = vpack.c.b16 %v1034, %v1032
        %v1069 = vpack.c.b16 %v1037, %v1035
        %v1070 = vpack.c.b16 %v1038, %v1036
        %1103 = vmatprep.subr.bf16.mxu0 %v1040
        %1104 = vmatpush1.bf16.msra.mxu0 %v1039
        %1105 = vmatprep.subr.bf16.mxu0 %v1042
        %1106 = vmatpush1.bf16.msra.mxu0 %v1041
        %1107 = vmatprep.subr.bf16.mxu0 %v1044
        %1108 = vmatpush1.bf16.msra.mxu0 %v1043
        %1109 = vmatprep.subr.bf16.mxu0 %v1046
        %1110 = vmatpush1.bf16.msra.mxu0 %v1045
        %1111 = vmatprep.subr.bf16.mxu0 %v1048
        %1112 = vmatpush1.bf16.msra.mxu0 %v1047
        %1113 = vmatprep.subr.bf16.mxu0 %v1050
        %1114 = vmatpush1.bf16.msra.mxu0 %v1049
        %1115 = vmatprep.subr.bf16.mxu0 %v1052
        %1116 = vmatpush1.bf16.msra.mxu0 %v1051
        %1117 = vmatprep.subr.bf16.mxu0 %v1054
        %1118 = vmatpush1.bf16.msra.mxu0 %v1053
        %1119 = vmatprep.subr.bf16.mxu0 %v1056
        %1120 = vmatpush1.bf16.msra.mxu0 %v1055
        %1121 = vmatprep.subr.bf16.mxu0 %v1058
        %1122 = vmatpush1.bf16.msra.mxu0 %v1057
        %1123 = vmatprep.subr.bf16.mxu0 %v1060
        %1124 = vmatpush1.bf16.msra.mxu0 %v1059
        %1125 = vmatprep.subr.bf16.mxu0 %v1062
        %1126 = vmatpush1.bf16.msra.mxu0 %v1061
        %1127 = vmatprep.subr.bf16.mxu0 %v1064
        %1128 = vmatpush1.bf16.msra.mxu0 %v1063
        %1129 = vmatprep.subr.bf16.mxu0 %v1066
        %1130 = vmatpush1.bf16.msra.mxu0 %v1065
        %1131 = vmatprep.subr.bf16.mxu0 %v1068
        %1132 = vmatpush1.bf16.msra.mxu0 %v1067
        %1133 = vmatprep.subr.bf16.mxu0 %v1070
        %1134 = vmatpush1.bf16.msra.mxu0 %v1069
        %1135 = vmatprep.mubr.bf16.mxu0 %v444
        %1136 = vmatmul.mubr.bf16.gmra.mrb[0].mxu0 %v443
        %v1137 = vpop.f32.mrb[0].mxu0
        %v1138 = vadd.f32 0.0, %v1137
        %v1139 = vpop.f32.mrb[0].mxu0
        %v1140 = vadd.f32 0.0, %v1139
        %v1141 = vpop.f32.mrb[0].mxu0
        %v1142 = vadd.f32 0.0, %v1141
        %v1143 = vpop.f32.mrb[0].mxu0
        %v1144 = vadd.f32 0.0, %v1143
        %1145 = vdwg.mxu0
        %v1146 = vadd.f32 %v906, %v1138
        %v1147 = vadd.f32 %v907, %v1140
        %v1148 = vadd.f32 %v908, %v1142
        %v1149 = vadd.f32 %v909, %v1144
        %1150 = vst [vmem:[#allocation4] sm:$0xff] %v1146
        %1151 = vst [vmem:[#allocation4 + $0x8] sm:$0xff] %v1147
        %1152 = vst [vmem:[#allocation4 + $0x10] sm:$0xff] %v1148
        %1153 = vst [vmem:[#allocation4 + $0x18] sm:$0xff] %v1149
        // Predicated region
        $region45: #{tpu_custom_call.1} parent=31 // pred_check
          %p1154 = pneg %p383
        $region46: #{tpu_custom_call.1} parent=31 // pred_check_branch
          %1156 = sbr.rel (%p1154) target = $region48
        $region47: #{tpu_custom_call.1} parent=31 // pred_region
          %v1157 = vld [vmem:[#allocation2] sm:$0xff]
          %v1158 = vld [vmem:[#allocation2 + $0x8] sm:$0xff]
          %v1159 = vld [vmem:[#allocation2 + $0x10] sm:$0xff]
          %v1160 = vld [vmem:[#allocation2 + $0x18] sm:$0xff]
          %v1161 = vld [vmem:[%s364] sm:$0x3]
          %v1163 = vlaneseq
          %v1164 = vshrl.u32 %v1163, 7
          %v1165 = vsub.s32 0, %v1164
          %v1166 = vrot.slane %v1161, %v1165
          %v1167 = vlaneseq
          %v1168 = vshrl.u32 %v1167, 7
          %v1169 = vsub.s32 1, %v1168
          %v1170 = vrot.slane %v1161, %v1169
          %v1173 = vadd.f32 %v1157, %v1166
          %v1174 = vadd.f32 %v1158, %v1170
          %v1175 = vadd.f32 %v1159, %v1166
          %v1176 = vadd.f32 %v1160, %v1170
          %v1177 = vpack.c.bf16 %v1175, %v1173
          %v1178 = vpack.c.bf16 %v1176, %v1174
          %v1181 = vunpack.c.l.b16 %v1177
          %v1182 = vunpack.c.l.b16 %v1178
          %v1183 = vunpack.c.h.b16 %v1177
          %v1184 = vunpack.c.h.b16 %v1178
          %v1185 = vpack.c.b16 %v1182, %v1181
          %v1186 = vpack.c.b16 %v1184, %v1183
          %1189 = vst [vmem:[%s335] sm:$0xff] %v1185
          %1190 = vst [vmem:[%s335 + $0x8] sm:$0xff] %v1186
          %v1191 = vld [vmem:[#allocation3] sm:$0xff]
          %v1192 = vld [vmem:[#allocation3 + $0x8] sm:$0xff]
          %v1193 = vld [vmem:[#allocation3 + $0x10] sm:$0xff]
          %v1194 = vld [vmem:[#allocation3 + $0x18] sm:$0xff]
          %s1195 = scalar_lea.vmem %s364, 2
          %v1196 = vld [vmem:[%s1195] sm:$0x3]
          %v1198 = vlaneseq
          %v1199 = vshrl.u32 %v1198, 7
          %v1200 = vsub.s32 0, %v1199
          %v1201 = vrot.slane %v1196, %v1200
          %v1202 = vlaneseq
          %v1203 = vshrl.u32 %v1202, 7
          %v1204 = vsub.s32 1, %v1203
          %v1205 = vrot.slane %v1196, %v1204
          %v1208 = vadd.f32 %v1191, %v1201
          %v1209 = vadd.f32 %v1192, %v1205
          %v1210 = vadd.f32 %v1193, %v1201
          %v1211 = vadd.f32 %v1194, %v1205
          %1212 = vxpose.xlu0.b32.start [1/16] %v1208, 128
          %1213 = vxpose.xlu0.b32.cont [2/16] %v1210, 128
          %1214 = vxpose.xlu0.b32.cont [3/16] 0.0, 128
          %1215 = vxpose.xlu0.b32.cont [4/16] 0.0, 128
          %1216 = vxpose.xlu0.b32.cont [5/16] 0.0, 128
          %1217 = vxpose.xlu0.b32.cont [6/16] 0.0, 128
          %1218 = vxpose.xlu0.b32.cont [7/16] 0.0, 128
          %1219 = vxpose.xlu0.b32.cont [8/16] 0.0, 128
          %1220 = vxpose.xlu0.b32.cont [9/16] 0.0, 128
          %1221 = vxpose.xlu0.b32.cont [10/16] 0.0, 128
          %1222 = vxpose.xlu0.b32.cont [11/16] 0.0, 128
          %1223 = vxpose.xlu0.b32.cont [12/16] 0.0, 128
          %1224 = vxpose.xlu0.b32.cont [13/16] 0.0, 128
          %1225 = vxpose.xlu0.b32.cont [14/16] 0.0, 128
          %1226 = vxpose.xlu0.b32.cont [15/16] 0.0, 128
          %1227 = vxpose.xlu0.b32.end [16/16] 0.0, 128
          %v1228 = vpop.trf.xlu0
          %v1229 = vpop.trf.xlu0
          %v1230 = vpop.trf.xlu0
          %v1231 = vpop.trf.xlu0
          %v1232 = vpop.trf.xlu0
          %v1233 = vpop.trf.xlu0
          %v1234 = vpop.trf.xlu0
          %v1235 = vpop.trf.xlu0
          %v1236 = vpop.trf.xlu0
          %v1237 = vpop.trf.xlu0
          %v1238 = vpop.trf.xlu0
          %v1239 = vpop.trf.xlu0
          %v1240 = vpop.trf.xlu0
          %v1241 = vpop.trf.xlu0
          %v1242 = vpop.trf.xlu0
          %v1243 = vpop.trf.xlu0
          %1244 = vxpose.xlu0.b32.start [1/16] %v1209, 128
          %1245 = vxpose.xlu0.b32.cont [2/16] %v1211, 128
          %1246 = vxpose.xlu0.b32.cont [3/16] 0.0, 128
          %1247 = vxpose.xlu0.b32.cont [4/16] 0.0, 128
          %1248 = vxpose.xlu0.b32.cont [5/16] 0.0, 128
          %1249 = vxpose.xlu0.b32.cont [6/16] 0.0, 128
          %1250 = vxpose.xlu0.b32.cont [7/16] 0.0, 128
          %1251 = vxpose.xlu0.b32.cont [8/16] 0.0, 128
          %1252 = vxpose.xlu0.b32.cont [9/16] 0.0, 128
          %1253 = vxpose.xlu0.b32.cont [10/16] 0.0, 128
          %1254 = vxpose.xlu0.b32.cont [11/16] 0.0, 128
          %1255 = vxpose.xlu0.b32.cont [12/16] 0.0, 128
          %1256 = vxpose.xlu0.b32.cont [13/16] 0.0, 128
          %1257 = vxpose.xlu0.b32.cont [14/16] 0.0, 128
          %1258 = vxpose.xlu0.b32.cont [15/16] 0.0, 128
          %1259 = vxpose.xlu0.b32.end [16/16] 0.0, 128
          %v1260 = vpop.trf.xlu0
          %v1261 = vpop.trf.xlu0
          %v1262 = vpop.trf.xlu0
          %v1263 = vpop.trf.xlu0
          %v1264 = vpop.trf.xlu0
          %v1265 = vpop.trf.xlu0
          %v1266 = vpop.trf.xlu0
          %v1267 = vpop.trf.xlu0
          %v1268 = vpop.trf.xlu0
          %v1269 = vpop.trf.xlu0
          %v1270 = vpop.trf.xlu0
          %v1271 = vpop.trf.xlu0
          %v1272 = vpop.trf.xlu0
          %v1273 = vpop.trf.xlu0
          %v1274 = vpop.trf.xlu0
          %v1275 = vpop.trf.xlu0
          %v1276 = vpack.c.bf16 %v1229, %v1228
          %v1277 = vpack.c.bf16 %v1231, %v1230
          %v1278 = vpack.c.bf16 %v1233, %v1232
          %v1279 = vpack.c.bf16 %v1235, %v1234
          %v1280 = vpack.c.bf16 %v1237, %v1236
          %v1281 = vpack.c.bf16 %v1239, %v1238
          %v1282 = vpack.c.bf16 %v1241, %v1240
          %v1283 = vpack.c.bf16 %v1243, %v1242
          %v1284 = vpack.c.bf16 %v1261, %v1260
          %v1285 = vpack.c.bf16 %v1263, %v1262
          %v1286 = vpack.c.bf16 %v1265, %v1264
          %v1287 = vpack.c.bf16 %v1267, %v1266
          %v1288 = vpack.c.bf16 %v1269, %v1268
          %v1289 = vpack.c.bf16 %v1271, %v1270
          %v1290 = vpack.c.bf16 %v1273, %v1272
          %v1291 = vpack.c.bf16 %v1275, %v1274
          %v1308 = vunpack.c.l.b16 %v1276
          %v1309 = vunpack.c.h.b16 %v1276
          %v1310 = vunpack.c.l.b16 %v1277
          %v1311 = vunpack.c.h.b16 %v1277
          %v1312 = vunpack.c.l.b16 %v1278
          %v1313 = vunpack.c.h.b16 %v1278
          %v1314 = vunpack.c.l.b16 %v1279
          %v1315 = vunpack.c.h.b16 %v1279
          %v1316 = vunpack.c.l.b16 %v1280
          %v1317 = vunpack.c.h.b16 %v1280
          %v1318 = vunpack.c.l.b16 %v1281
          %v1319 = vunpack.c.h.b16 %v1281
          %v1320 = vunpack.c.l.b16 %v1282
          %v1321 = vunpack.c.h.b16 %v1282
          %v1322 = vunpack.c.l.b16 %v1283
          %v1323 = vunpack.c.h.b16 %v1283
          %v1324 = vunpack.c.l.b16 %v1284
          %v1325 = vunpack.c.h.b16 %v1284
          %v1326 = vunpack.c.l.b16 %v1285
          %v1327 = vunpack.c.h.b16 %v1285
          %v1328 = vunpack.c.l.b16 %v1286
          %v1329 = vunpack.c.h.b16 %v1286
          %v1330 = vunpack.c.l.b16 %v1287
          %v1331 = vunpack.c.h.b16 %v1287
          %v1332 = vunpack.c.l.b16 %v1288
          %v1333 = vunpack.c.h.b16 %v1288
          %v1334 = vunpack.c.l.b16 %v1289
          %v1335 = vunpack.c.h.b16 %v1289
          %v1336 = vunpack.c.l.b16 %v1290
          %v1337 = vunpack.c.h.b16 %v1290
          %v1338 = vunpack.c.l.b16 %v1291
          %v1339 = vunpack.c.h.b16 %v1291
          %v1340 = vpack.c.b16 %v1308, %v1308
          %v1341 = vpack.c.b16 %v1309, %v1309
          %v1342 = vpack.c.b16 %v1310, %v1310
          %v1343 = vpack.c.b16 %v1311, %v1311
          %v1344 = vpack.c.b16 %v1312, %v1312
          %v1345 = vpack.c.b16 %v1313, %v1313
          %v1346 = vpack.c.b16 %v1314, %v1314
          %v1347 = vpack.c.b16 %v1315, %v1315
          %v1348 = vpack.c.b16 %v1316, %v1316
          %v1349 = vpack.c.b16 %v1317, %v1317
          %v1350 = vpack.c.b16 %v1318, %v1318
          %v1351 = vpack.c.b16 %v1319, %v1319
          %v1352 = vpack.c.b16 %v1320, %v1320
          %v1353 = vpack.c.b16 %v1321, %v1321
          %v1354 = vpack.c.b16 %v1322, %v1322
          %v1355 = vpack.c.b16 %v1323, %v1323
          %v1356 = vpack.c.b16 %v1324, %v1324
          %v1357 = vpack.c.b16 %v1325, %v1325
          %v1358 = vpack.c.b16 %v1326, %v1326
          %v1359 = vpack.c.b16 %v1327, %v1327
          %v1360 = vpack.c.b16 %v1328, %v1328
          %v1361 = vpack.c.b16 %v1329, %v1329
          %v1362 = vpack.c.b16 %v1330, %v1330
          %v1363 = vpack.c.b16 %v1331, %v1331
          %v1364 = vpack.c.b16 %v1332, %v1332
          %v1365 = vpack.c.b16 %v1333, %v1333
          %v1366 = vpack.c.b16 %v1334, %v1334
          %v1367 = vpack.c.b16 %v1335, %v1335
          %v1368 = vpack.c.b16 %v1336, %v1336
          %v1369 = vpack.c.b16 %v1337, %v1337
          %v1370 = vpack.c.b16 %v1338, %v1338
          %v1371 = vpack.c.b16 %v1339, %v1339
          %vm1404 = vcmask 125952
          %1405 = vst.msk [vmem:[%s379] sm:$0xf] %vm1404, %v1340
          %1406 = vst.msk [vmem:[%s379 + $0x4] sm:$0xf] %vm1404, %v1341
          %1407 = vst.msk [vmem:[%s379 + $0x8] sm:$0xf] %vm1404, %v1342
          %1408 = vst.msk [vmem:[%s379 + $0xc] sm:$0xf] %vm1404, %v1343
          %1409 = vst.msk [vmem:[%s379 + $0x10] sm:$0xf] %vm1404, %v1344
          %1410 = vst.msk [vmem:[%s379 + $0x14] sm:$0xf] %vm1404, %v1345
          %1411 = vst.msk [vmem:[%s379 + $0x18] sm:$0xf] %vm1404, %v1346
          %1412 = vst.msk [vmem:[%s379 + $0x1c] sm:$0xf] %vm1404, %v1347
          %1413 = vst.msk [vmem:[%s379 + $0x20] sm:$0xf] %vm1404, %v1348
          %1414 = vst.msk [vmem:[%s379 + $0x24] sm:$0xf] %vm1404, %v1349
          %1415 = vst.msk [vmem:[%s379 + $0x28] sm:$0xf] %vm1404, %v1350
          %1416 = vst.msk [vmem:[%s379 + $0x2c] sm:$0xf] %vm1404, %v1351
          %1417 = vst.msk [vmem:[%s379 + $0x30] sm:$0xf] %vm1404, %v1352
          %1418 = vst.msk [vmem:[%s379 + $0x34] sm:$0xf] %vm1404, %v1353
          %1419 = vst.msk [vmem:[%s379 + $0x38] sm:$0xf] %vm1404, %v1354
          %1420 = vst.msk [vmem:[%s379 + $0x3c] sm:$0xf] %vm1404, %v1355
          %1421 = vst.msk [vmem:[%s379 + $0x40] sm:$0xf] %vm1404, %v1356
          %1422 = vst.msk [vmem:[%s379 + $0x44] sm:$0xf] %vm1404, %v1357
          %1423 = vst.msk [vmem:[%s379 + $0x48] sm:$0xf] %vm1404, %v1358
          %1424 = vst.msk [vmem:[%s379 + $0x4c] sm:$0xf] %vm1404, %v1359
          %1425 = vst.msk [vmem:[%s379 + $0x50] sm:$0xf] %vm1404, %v1360
          %1426 = vst.msk [vmem:[%s379 + $0x54] sm:$0xf] %vm1404, %v1361
          %1427 = vst.msk [vmem:[%s379 + $0x58] sm:$0xf] %vm1404, %v1362
          %1428 = vst.msk [vmem:[%s379 + $0x5c] sm:$0xf] %vm1404, %v1363
          %1429 = vst.msk [vmem:[%s379 + $0x60] sm:$0xf] %vm1404, %v1364
          %1430 = vst.msk [vmem:[%s379 + $0x64] sm:$0xf] %vm1404, %v1365
          %1431 = vst.msk [vmem:[%s379 + $0x68] sm:$0xf] %vm1404, %v1366
          %1432 = vst.msk [vmem:[%s379 + $0x6c] sm:$0xf] %vm1404, %v1367
          %1433 = vst.msk [vmem:[%s379 + $0x70] sm:$0xf] %vm1404, %v1368
          %1434 = vst.msk [vmem:[%s379 + $0x74] sm:$0xf] %vm1404, %v1369
          %1435 = vst.msk [vmem:[%s379 + $0x78] sm:$0xf] %vm1404, %v1370
          %1436 = vst.msk [vmem:[%s379 + $0x7c] sm:$0xf] %vm1404, %v1371
          %v1437 = vld [vmem:[#allocation4] sm:$0xff]
          %v1438 = vld [vmem:[#allocation4 + $0x8] sm:$0xff]
          %v1439 = vld [vmem:[#allocation4 + $0x10] sm:$0xff]
          %v1440 = vld [vmem:[#allocation4 + $0x18] sm:$0xff]
          %s1441 = scalar_lea.vmem %s364, 4
          %v1442 = vld [vmem:[%s1441] sm:$0x3]
          %v1444 = vlaneseq
          %v1445 = vshrl.u32 %v1444, 7
          %v1446 = vsub.s32 0, %v1445
          %v1447 = vrot.slane %v1442, %v1446
          %v1448 = vlaneseq
          %v1449 = vshrl.u32 %v1448, 7
          %v1450 = vsub.s32 1, %v1449
          %v1451 = vrot.slane %v1442, %v1450
          %v1454 = vadd.f32 %v1437, %v1447
          %v1455 = vadd.f32 %v1438, %v1451
          %v1456 = vadd.f32 %v1439, %v1447
          %v1457 = vadd.f32 %v1440, %v1451
          %v1458 = vpack.c.bf16 %v1456, %v1454
          %v1459 = vpack.c.bf16 %v1457, %v1455
          %v1462 = vunpack.c.l.b16 %v1458
          %v1463 = vunpack.c.l.b16 %v1459
          %v1464 = vunpack.c.h.b16 %v1458
          %v1465 = vunpack.c.h.b16 %v1459
          %v1466 = vpack.c.b16 %v1463, %v1462
          %v1467 = vpack.c.b16 %v1465, %v1464
          %1470 = vst [vmem:[%s356] sm:$0xff] %v1466
          %1471 = vst [vmem:[%s356 + $0x8] sm:$0xff] %v1467
        $region48: #{tpu_custom_call.1} parent=31 // pred_fallthru
          _
        %s1472 = sand.u32 %s149, 1
        %s1473 = scalar_lea.sflag [#allocation7], %s1472
        %s1474 = sand.u32 %s149, 1
        %s1475 = smul.addr %s1474, 16
        %s1476 = scalar_lea.vmem [#allocation10], %s1475
        %s1477 = smul.u32 32, %s35
        %p1478 = scmp.lt.s32.totalorder %s33, 1
        %s1479 = scalar_select %p1478, %s33, 1
        %p1480 = scmp.lt.s32.totalorder %s1477, 31
        %s1481 = scalar_select %p1480, %s1477, 31
        %p1482 = scmp.lt.s32.totalorder %s34, 0
        %s1483 = scalar_select %p1482, %s34, 0
        %s1484 = sadd.s32 %s1483, %s1481
        %s1485 = smul.addr %s1479, 32
        %s1486 = sadd.s32 %s1484, %s1485
        %s1487 = smul.addr %s1486, 4
        %s1488 = scalar_lea.vmem %s4, %s1487
        %s1489 = sand.u32 %s209, 1
        %s1490 = scalar_lea.sflag [#allocation12], %s1489
        %s1491 = sand.u32 %s209, 1
        %s1492 = smul.addr %s1491, 16
        %s1493 = scalar_lea.vmem [#allocation11], %s1492
        // Predicated region
        $region49: #{tpu_custom_call.1} parent=31 // pred_check
          %p1494 = pneg %p159
        $region50: #{tpu_custom_call.1} parent=31 // pred_check_branch
          %1496 = sbr.rel (%p1494) target = $region52
        $region51: #{tpu_custom_call.1} parent=31 // pred_region
          %s1497 = smul.u32 2, %s34
          %s1498 = smul.u32 2, %s35
          %s1500 = ssub.s32 256, 256
          %1501 = vsyncadd %s1473, %s1500
          %s1502 = smul.addr %s1497, 2
          %s1503 = sadd.s32 %s1498, %s1502
          %s1504 = smul.addr %s33, 4
          %s1505 = sadd.s32 %s1503, %s1504
          %s1506 = smul.addr %s1505, 64
          %s1507 = scalar_lea.hbm %s3, %s1506
          %s1508 = sshll.u32 %s1476, 4
          %s1509 = int_to_ptr.vmem [resolvable:$true] %s1508
          %1514 = dma.vmem_to_hbm [thread:$0]  %s1509, 256, %s1507, %s1473, 128, 128, 8
        $region52: #{tpu_custom_call.1} parent=31 // pred_fallthru
          _
        // Predicated region
        $region53: #{tpu_custom_call.1} parent=31 // pred_check
          %p1515 = pneg %p189
        $region54: #{tpu_custom_call.1} parent=31 // pred_check_branch
          %1517 = sbr.rel (%p1515) target = $region56
        $region55: #{tpu_custom_call.1} parent=31 // pred_region
          %s1518 = smul.u32 32, %s35
        $region56: #{tpu_custom_call.1} parent=31 // pred_fallthru
          _
        // Predicated region
        $region57: #{tpu_custom_call.1} parent=31 // pred_check
          %p1519 = pneg %p219
        $region58: #{tpu_custom_call.1} parent=31 // pred_check_branch
          %1521 = sbr.rel (%p1519) target = $region60
        $region59: #{tpu_custom_call.1} parent=31 // pred_region
          %s1522 = smul.u32 2, %s34
          %s1523 = smul.u32 2, %s35
          %s1525 = ssub.s32 256, 256
          %1526 = vsyncadd %s1490, %s1525
          %s1527 = smul.addr %s1522, 2
          %s1528 = sadd.s32 %s1523, %s1527
          %s1529 = smul.addr %s33, 4
          %s1530 = sadd.s32 %s1528, %s1529
          %s1531 = smul.addr %s1530, 64
          %s1532 = scalar_lea.hbm %s5, %s1531
          %s1533 = sshll.u32 %s1493, 4
          %s1534 = int_to_ptr.vmem [resolvable:$true] %s1533
          %1539 = dma.vmem_to_hbm [thread:$0]  %s1534, 256, %s1532, %s1490, 128, 128, 8
        $region60: #{tpu_custom_call.1} parent=31 // pred_fallthru
          _
      $region32: #{tpu_custom_call.1} parent=5 // pred_fallthru
        _
      %p1540 = scmp.le.s32.totalorder 2, %s22
      // Predicated region
      $region61: #{tpu_custom_call.1} parent=5 // pred_check
        %p1541 = pneg %p1540
      $region62: #{tpu_custom_call.1} parent=5 // pred_check_branch
        %1543 = sbr.rel (%p1541) target = $region64
      $region63: #{tpu_custom_call.1} parent=5 // pred_region
        %s1544 = ssub.s32 %s22, 2
        // Predicated region
        $region65: #{tpu_custom_call.1} parent=63 // pred_check
          %p1545 = pneg %p165
        $region66: #{tpu_custom_call.1} parent=63 // pred_check_branch
          %1547 = sbr.rel (%p1545) target = $region68
        $region67: #{tpu_custom_call.1} parent=63 // pred_region
          %s1548 = sand.u32 %s150, 1
          %s1549 = scalar_lea.sflag [#allocation7], %s1548
          %s1550 = sand.u32 %s150, 1
          %s1551 = smul.addr %s1550, 16
          %s1552 = scalar_lea.vmem [#allocation10], %s1551
          %1553 = dma.done %s1549, 256
        $region68: #{tpu_custom_call.1} parent=63 // pred_fallthru
          _
        // Predicated region
        $region69: #{tpu_custom_call.1} parent=63 // pred_check
          %p1554 = pneg %p195
        $region70: #{tpu_custom_call.1} parent=63 // pred_check_branch
          %1556 = sbr.rel (%p1554) target = $region72
        $region71: #{tpu_custom_call.1} parent=63 // pred_region
          %s1557 = smul.u32 32, %s39
          %p1558 = scmp.lt.s32.totalorder %s37, 1
          %s1559 = scalar_select %p1558, %s37, 1
          %p1560 = scmp.lt.s32.totalorder %s1557, 31
          %s1561 = scalar_select %p1560, %s1557, 31
          %p1562 = scmp.lt.s32.totalorder %s38, 0
          %s1563 = scalar_select %p1562, %s38, 0
          %s1564 = sadd.s32 %s1563, %s1561
          %s1565 = smul.addr %s1559, 32
          %s1566 = sadd.s32 %s1564, %s1565
          %s1567 = smul.addr %s1566, 4
          %s1568 = scalar_lea.vmem %s4, %s1567
        $region72: #{tpu_custom_call.1} parent=63 // pred_fallthru
          _
        // Predicated region
        $region73: #{tpu_custom_call.1} parent=63 // pred_check
          %p1569 = pneg %p225
        $region74: #{tpu_custom_call.1} parent=63 // pred_check_branch
          %1571 = sbr.rel (%p1569) target = $region76
        $region75: #{tpu_custom_call.1} parent=63 // pred_region
          %s1572 = sand.u32 %s210, 1
          %s1573 = scalar_lea.sflag [#allocation12], %s1572
          %s1574 = sand.u32 %s210, 1
          %s1575 = smul.addr %s1574, 16
          %s1576 = scalar_lea.vmem [#allocation11], %s1575
          %1577 = dma.done %s1573, 256
        $region76: #{tpu_custom_call.1} parent=63 // pred_fallthru
          _
      $region64: #{tpu_custom_call.1} parent=5 // pred_fallthru
        _
    $region6: #{tpu_custom_call.1} parent=1 // loop_footer
      %s26 = sadd.s32 1, %s22
    $region7: #{tpu_custom_call.1} parent=1 // loop_footer_branch
      %21 = sbr.rel target = $region3
    $region8: #{tpu_custom_call.1} parent=1 // loop_exit
      _
    %1578 = vsyncpa [#allocation6], 1
    %s1579 = scalar_lea.sflag [#allocation6], 1
    %1580 = vsyncpa %s1579, 1
    %1581 = vsyncpa [#allocation9], 1
    %1582 = vsyncpa [#allocation7], 1
    %s1583 = scalar_lea.sflag [#allocation7], 1
    %1584 = vsyncpa %s1583, 1
    %1585 = vsyncpa [#allocation12], 1
    %s1586 = scalar_lea.sflag [#allocation12], 1
    %1587 = vsyncpa %s1586, 1

</llo_original>
